<compile_context>
chip_gen: v7x
topology: tpu7x:2x2x1
jax: 0.10.0
libtpu: 0.0.40
codegen_flags: <defaults>
</compile_context>

<pallas_src>
import functools

import jax
import jax.numpy as jnp
import numpy as np
from jax.experimental import pallas as pl
from jax.experimental.pallas import tpu as pltpu


# ------------------------------------------------------------ shared conv --
def _conv_phase(x_ref, w_ref, t, *, k, d, pool, t_pool):
    """Dilated conv output for pool-phase t: (C_out, t_pool) f32.

    x_ref: (pool, C_in, t_pool + q_max)  phase-split input tile (bf16)
    w_ref: (k, C_out, C_in)              per-tap weights (bf16)
    """
    acc = None
    for j in range(k):                         # static tap loop
        u = t + j * d
        r, q = u % pool, u // pool             # compile-time constants
        xs = x_ref[r, :, pl.ds(q, t_pool)]     # (C_in, t_pool) static slice
        part = jnp.dot(w_ref[j], xs, preferred_element_type=jnp.float32)
        acc = part if acc is None else acc + part
    return acc


# --------------------------------------------------------------- pass 1 ----
def _stats_kernel(x_ref, w_ref, sum_ref, sq_ref, *, k, d, pool, t_pool, l_out):
    """Lane-wide per-channel sum / sum-of-squares of the conv output."""
    jt = pl.program_id(1)
    last = pl.num_programs(1) - 1

    @pl.when(jt == 0)
    def _():
        sum_ref[...] = jnp.zeros_like(sum_ref)
        sq_ref[...] = jnp.zeros_like(sq_ref)

    for t in range(pool):                      # static, pool == 3
        conv_t = _conv_phase(x_ref, w_ref, t, k=k, d=d, pool=pool, t_pool=t_pool)

        @pl.when(jt != last)                   # interior tiles: no masking
        def _():
            sum_ref[...] += conv_t
            sq_ref[...] += conv_t * conv_t

        @pl.when(jt == last)                   # only the last tile pays for it
        def _():
            lane = jax.lax.broadcasted_iota(jnp.int32, conv_t.shape, 1)
            col = (jt * t_pool + lane) * pool + t      # global conv column
            m = jnp.where(col < l_out, conv_t, 0.0)
            sum_ref[...] += m
            sq_ref[...] += m * conv_t


# --------------------------------------------------------------- pass 2 ----
def _apply_kernel(x_ref, w_ref, scale_ref, shift_ref, o_ref, *, k, d, pool, t_pool):
    """conv -> fused BatchNorm (per-channel FMA) -> ReLU -> MaxPool(3)."""
    scale = scale_ref[...]                     # (C_out, 1) f32
    shift = shift_ref[...]                     # (C_out, 1) f32
    pooled = None
    for t in range(pool):                      # static, pool == 3
        conv_t = _conv_phase(x_ref, w_ref, t, k=k, d=d, pool=pool, t_pool=t_pool)
        h_t = jnp.maximum(conv_t * scale + shift, 0.0)
        pooled = h_t if pooled is None else jnp.maximum(pooled, h_t)
    o_ref[...] = pooled.astype(o_ref.dtype)


# --------------------------------------------------------- tile sizing -----
def _auto_tiling(c_out):
    """Per-generation pooled-tile width and scoped-VMEM limit."""
    vmem_cap = 64 * 1024 * 1024
    try:
        info = pltpu.get_tpu_info()
        vmem_cap = int(getattr(info, "vmem_capacity_bytes", vmem_cap))
    except Exception:
        pass
    if vmem_cap >= 96 * 1024 * 1024:           # v5e / v6e: 128 MiB VMEM
        tile, limit = 1024, 64 * 1024 * 1024
    else:                                      # v7x: 64 MiB VMEM
        tile, limit = 512, 32 * 1024 * 1024
    # Keep ~16 live f32 (C_out, t_pool) slabs (intermediates + double buffers)
    # comfortably inside the scoped budget for very wide C_out.
    cap = max(128, (limit // (16 * 4 * max(c_out, 1))) // 128 * 128)
    return min(tile, cap), limit


# --------------------------------------------------------------- wrapper ---
def temporal_conv(x, weight, bias, gamma, beta, *, k, d, causal=False,
                  pool=3, eps=1e-5, tile_pooled=None,
                  compute_dtype=jnp.bfloat16):
    """x: (N, C_in, L) f32, weight: (C_out, C_in, K) -> (N, C_out, L_out // pool)."""
    # Conv bias is exactly cancelled by the training-mode (batch-stat) BatchNorm
    # that immediately follows the conv, so it is dropped on purpose.
    del bias
    out_dtype = x.dtype
    n, c_in, _ = x.shape
    c_out = weight.shape[0]
    halo = (k - 1) * d
    # Note: causal with k == 1 makes the PyTorch source slice h[:, :, :-0]
    # (empty tensor); we keep the mathematically sensible behaviour instead.
    if causal:                                 # padding=p then h[..., :-p]
        x = jnp.pad(x, ((0, 0), (0, 0), (halo, 0)))
    l_in = x.shape[-1]
    l_out = l_in - halo                        # VALID conv output length
    assert l_out >= 1, "sequence too short for this kernel/dilation"
    l_pool = l_out // pool                     # MaxPool1d floor behaviour

    # ---- tile sizing (pooled lanes per grid step, always 128-aligned) ------
    if tile_pooled is None:
        tile_pooled, vmem_limit = _auto_tiling(c_out)
    else:
        vmem_limit = 64 * 1024 * 1024
    need = -(-l_out // pool)                   # pooled columns needed
    if need <= tile_pooled:
        t_pool = max(-(-need // 128) * 128, 128)
        n_tiles = 1
    else:
        t_pool = tile_pooled
        n_tiles = -(-need // t_pool)
    p_total = n_tiles * t_pool
    q_max = (pool - 1 + halo) // pool          # pooled-axis halo for the taps
    t_lane = t_pool + q_max

    # ---- wrapper-side layout: phase-split input with per-tile halo ---------
    # xph[b, jt, s, c, p] = x[b, c, pool*(jt*t_pool + p) + s]   (bf16)
    # Total bytes ~= x bytes (no k-fold im2col blowup); per-tile halo
    # duplication is only q_max / t_pool of the tile.
    l_need = pool * (p_total + q_max)
    x = jnp.pad(x, ((0, 0), (0, 0), (0, l_need - l_in))).astype(compute_dtype)
    tiles = []
    for jt in range(n_tiles):
        start = pool * jt * t_pool
        seg = x[:, :, start:start + pool * t_lane]             # (N, C_in, 3*t_lane)
        seg = seg.reshape(n, c_in, t_lane, pool).transpose(0, 3, 1, 2)
        tiles.append(seg)                                      # (N, pool, C_in, t_lane)
    xph = jnp.stack(tiles, axis=1)             # (N, n_tiles, pool, C_in, t_lane)
    w3 = jnp.moveaxis(weight, 2, 0).astype(compute_dtype)      # (k, C_out, C_in)

    x_spec = pl.BlockSpec((None, None, pool, c_in, t_lane),
                          lambda b, jt: (b, jt, 0, 0, 0))
    w_spec = pl.BlockSpec((k, c_out, c_in), lambda b, jt: (0, 0, 0))
    vec_spec = pl.BlockSpec((c_out, 1), lambda b, jt: (0, 0))
    acc_spec = pl.BlockSpec((None, c_out, t_pool), lambda b, jt: (b, 0, 0))
    out_spec = pl.BlockSpec((None, c_out, t_pool), lambda b, jt: (b, 0, jt))

    elt = jnp.dtype(compute_dtype).itemsize
    flops = 2 * n * c_out * c_in * k * pool * p_total
    xph_bytes = int(np.prod(xph.shape)) * elt
    cost1 = pl.CostEstimate(flops=flops, transcendentals=0,
                            bytes_accessed=xph_bytes + 2 * n * c_out * t_pool * 4)
    cost2 = pl.CostEstimate(
        flops=flops, transcendentals=0,
        bytes_accessed=xph_bytes + n * c_out * p_total * jnp.dtype(out_dtype).itemsize)

    # ---- pass 1: per-channel conv statistics (lane-wide, batch-parallel) ----
    sums, sqs = pl.pallas_call(
        functools.partial(_stats_kernel, k=k, d=d, pool=pool,
                          t_pool=t_pool, l_out=l_out),
        grid=(n, n_tiles),
        in_specs=[x_spec, w_spec],
        out_specs=[acc_spec, acc_spec],
        out_shape=[jax.ShapeDtypeStruct((n, c_out, t_pool), jnp.float32),
                   jax.ShapeDtypeStruct((n, c_out, t_pool), jnp.float32)],
        compiler_params=pltpu.CompilerParams(
            dimension_semantics=("parallel", "arbitrary"),
            vmem_limit_bytes=vmem_limit),
        cost_estimate=cost1,
    )(xph, w3)

    # ---- fold BatchNorm into a per-channel FMA (tiny, plain JAX) -----------
    count = n * l_out
    s = jnp.sum(sums, axis=(0, 2), dtype=jnp.float32)
    ss = jnp.sum(sqs, axis=(0, 2), dtype=jnp.float32)
    mean = s / count
    # Single-pass E[h^2] - E[h]^2 in f32; clamp guards tiny negative residue.
    var = jnp.maximum(ss / count - mean * mean, 0.0)
    scale = gamma.astype(jnp.float32) * jax.lax.rsqrt(var + eps)
    shift = beta.astype(jnp.float32) - mean * scale

    # ---- pass 2: conv + BN-FMA + ReLU + MaxPool(3) --------------------------
    out = pl.pallas_call(
        functools.partial(_apply_kernel, k=k, d=d, pool=pool, t_pool=t_pool),
        grid=(n, n_tiles),
        in_specs=[x_spec, w_spec, vec_spec, vec_spec],
        out_specs=out_spec,
        out_shape=jax.ShapeDtypeStruct((n, c_out, p_total), out_dtype),
        compiler_params=pltpu.CompilerParams(
            dimension_semantics=("parallel", "parallel"),
            vmem_limit_bytes=vmem_limit),
        cost_estimate=cost2,
    )(xph, w3, scale.reshape(c_out, 1), shift.reshape(c_out, 1))

    return out[:, :, :l_pool]                  # trim L padding (floor pooling)


# -------------------------------------------------------------- reference --
def _reference(x, weight, bias, gamma, beta, *, k, d, causal, pool=3, eps=1e-5):
    """Plain-JAX f32 reference mirroring the PyTorch forward."""
    if causal:
        p = (k - 1) * d
        x = jnp.pad(x, ((0, 0), (0, 0), (p, 0)))
    h = jax.lax.conv_general_dilated(
        x, weight, window_strides=(1,), padding='VALID',
        rhs_dilation=(d,), dimension_numbers=('NCH', 'OIH', 'NCH'))
    h = h + bias[None, :, None]
    mean = jnp.mean(h, axis=(0, 2), keepdims=True)
    var = jnp.mean((h - mean) ** 2, axis=(0, 2), keepdims=True)
    h = (h - mean) / jnp.sqrt(var + eps) * gamma[None, :, None] + beta[None, :, None]
    h = jnp.maximum(h, 0.0)
    lp = h.shape[-1] // pool
    return h[:, :, :lp * pool].reshape(h.shape[0], h.shape[1], lp, pool).max(-1)


if __name__ == "__main__":
    def run_case(n, c_in, l, filters, k, d, causal):
        key = jax.random.PRNGKey(0)
        kx, kw, kb, kg, kbe = jax.random.split(key, 5)
        x = jax.random.normal(kx, (n, c_in, l), dtype=jnp.float32)
        weight = jax.random.normal(kw, (filters, c_in, k), dtype=jnp.float32) * 0.3
        bias = jax.random.normal(kb, (filters,), dtype=jnp.float32) * 0.1
        gamma = 1.0 + 0.1 * jax.random.normal(kg, (filters,), dtype=jnp.float32)
        beta = 0.1 * jax.random.normal(kbe, (filters,), dtype=jnp.float32)

        out = temporal_conv(x, weight, bias, gamma, beta, k=k, d=d, causal=causal)
        out = jax.block_until_ready(out)
        ref = _reference(x, weight, bias, gamma, beta, k=k, d=d, causal=causal)
        # bf16 matmul inputs (f32 accumulation) -> loose-ish tolerance.
        np.testing.assert_allclose(np.asarray(out), np.asarray(ref),
                                   rtol=3e-2, atol=3e-2)

    # small config matching the module defaults (single L tile, non-causal)
    run_case(n=2, c_in=4, l=16, filters=8, k=3, d=1, causal=False)
    # causal + dilation + long enough sequence to exercise the multi-tile grid
    run_case(n=2, c_in=4, l=4000, filters=32, k=3, d=2, causal=True)
    print("KERNEL_OK")
</pallas_src>

<mosaic_0001>
module attributes {stable_mosaic.version = 11 : i64} {
  func.func @_stats_kernel(%arg0: i32, %arg1: i32, %arg2: memref<1x1x3x4x129xbf16, #tpu.memory_space<vmem>>, %arg3: memref<3x8x4xbf16, #tpu.memory_space<vmem>>, %arg4: memref<1x8x128xf32, #tpu.memory_space<vmem>>, %arg5: memref<1x8x128xf32, #tpu.memory_space<vmem>>) attributes {dimension_semantics = [#tpu.dimension_semantics<parallel>, #tpu.dimension_semantics<arbitrary>], iteration_bounds = array<i64: 2, 1>, scalar_prefetch = 0 : i64, scratch_operands = 0 : i64, tpu.core_type = #tpu.core_type<tc>, window_params = [{transform_indices = @transform_0, window_bounds = array<i64: 1, 1, 3, 4, 129>}, {pipeline_mode = #tpu.pipeline_mode<synchronous>, transform_indices = @transform_1, window_bounds = array<i64: 3, 8, 4>}, {transform_indices = @transform_2, window_bounds = array<i64: 1, 8, 128>}, {transform_indices = @transform_3, window_bounds = array<i64: 1, 8, 128>}]} {
    %c0_i32 = arith.constant 0 : i32
    %0 = arith.cmpi eq, %arg1, %c0_i32 : i32
    %1 = arith.extui %0 : i1 to i32
    %c0_i32_0 = arith.constant 0 : i32
    %2 = arith.cmpi ne, %1, %c0_i32_0 : i32
    scf.if %2 {
      %cst_90 = arith.constant 0.000000e+00 : f32
      %72 = vector.broadcast %cst_90 : f32 to vector<8x128xf32>
      %c0_91 = arith.constant 0 : index
      %c0_92 = arith.constant 0 : index
      %c0_93 = arith.constant 0 : index
      %73 = vector.load %arg4[%c0_91, %c0_92, %c0_93] : memref<1x8x128xf32, #tpu.memory_space<vmem>>, vector<1x8x128xf32>
      %74 = vector.shape_cast %73 : vector<1x8x128xf32> to vector<8x128xf32>
      %75 = vector.shape_cast %72 : vector<8x128xf32> to vector<1x8x128xf32>
      tpu.vector_store %arg4[%c0_91, %c0_92, %c0_93], %75 {strides = array<i32>} : memref<1x8x128xf32, #tpu.memory_space<vmem>>, vector<1x8x128xf32>,
      %cst_94 = arith.constant 0.000000e+00 : f32
      %76 = vector.broadcast %cst_94 : f32 to vector<8x128xf32>
      %c0_95 = arith.constant 0 : index
      %c0_96 = arith.constant 0 : index
      %c0_97 = arith.constant 0 : index
      %77 = vector.load %arg5[%c0_95, %c0_96, %c0_97] : memref<1x8x128xf32, #tpu.memory_space<vmem>>, vector<1x8x128xf32>
      %78 = vector.shape_cast %77 : vector<1x8x128xf32> to vector<8x128xf32>
      %79 = vector.shape_cast %76 : vector<8x128xf32> to vector<1x8x128xf32>
      tpu.vector_store %arg5[%c0_95, %c0_96, %c0_97], %79 {strides = array<i32>} : memref<1x8x128xf32, #tpu.memory_space<vmem>>, vector<1x8x128xf32>,
    } else {
    }
    %c0 = arith.constant 0 : index
    %c0_1 = arith.constant 0 : index
    %c0_2 = arith.constant 0 : index
    %c0_3 = arith.constant 0 : index
    %c0_4 = arith.constant 0 : index
    %3 = vector.load %arg2[%c0, %c0_1, %c0_2, %c0_3, %c0_4] : memref<1x1x3x4x129xbf16, #tpu.memory_space<vmem>>, vector<1x1x1x4x128xbf16>
    %4 = vector.shape_cast %3 : vector<1x1x1x4x128xbf16> to vector<4x128xbf16>
    %c0_5 = arith.constant 0 : index
    %c0_6 = arith.constant 0 : index
    %c0_7 = arith.constant 0 : index
    %5 = vector.load %arg3[%c0_5, %c0_6, %c0_7] : memref<3x8x4xbf16, #tpu.memory_space<vmem>>, vector<1x8x4xbf16>
    %6 = vector.shape_cast %5 : vector<1x8x4xbf16> to vector<8x4xbf16>
    %cst = arith.constant dense<0.000000e+00> : vector<8x128xf32>
    %7 = tpu.matmul %6, %4, %cst {dimension_numbers = #tpu.dot_dimension_numbers<[1], [0], [0], [1], [0, 0, 1, 1], [], []>} : vector<8x4xbf16>, vector<4x128xbf16>, vector<8x128xf32> -> vector<8x128xf32>
    %c0_8 = arith.constant 0 : index
    %c0_9 = arith.constant 0 : index
    %c1 = arith.constant 1 : index
    %c0_10 = arith.constant 0 : index
    %c0_11 = arith.constant 0 : index
    %8 = vector.load %arg2[%c0_8, %c0_9, %c1, %c0_10, %c0_11] : memref<1x1x3x4x129xbf16, #tpu.memory_space<vmem>>, vector<1x1x1x4x128xbf16>
    %9 = vector.shape_cast %8 : vector<1x1x1x4x128xbf16> to vector<4x128xbf16>
    %c1_12 = arith.constant 1 : index
    %c0_13 = arith.constant 0 : index
    %c0_14 = arith.constant 0 : index
    %10 = vector.load %arg3[%c1_12, %c0_13, %c0_14] : memref<3x8x4xbf16, #tpu.memory_space<vmem>>, vector<1x8x4xbf16>
    %11 = vector.shape_cast %10 : vector<1x8x4xbf16> to vector<8x4xbf16>
    %cst_15 = arith.constant dense<0.000000e+00> : vector<8x128xf32>
    %12 = tpu.matmul %11, %9, %cst_15 {dimension_numbers = #tpu.dot_dimension_numbers<[1], [0], [0], [1], [0, 0, 1, 1], [], []>} : vector<8x4xbf16>, vector<4x128xbf16>, vector<8x128xf32> -> vector<8x128xf32>
    %13 = arith.addf %7, %12 : vector<8x128xf32>
    %c0_16 = arith.constant 0 : index
    %c0_17 = arith.constant 0 : index
    %c2 = arith.constant 2 : index
    %c0_18 = arith.constant 0 : index
    %c0_19 = arith.constant 0 : index
    %14 = vector.load %arg2[%c0_16, %c0_17, %c2, %c0_18, %c0_19] : memref<1x1x3x4x129xbf16, #tpu.memory_space<vmem>>, vector<1x1x1x4x128xbf16>
    %15 = vector.shape_cast %14 : vector<1x1x1x4x128xbf16> to vector<4x128xbf16>
    %c2_20 = arith.constant 2 : index
    %c0_21 = arith.constant 0 : index
    %c0_22 = arith.constant 0 : index
    %16 = vector.load %arg3[%c2_20, %c0_21, %c0_22] : memref<3x8x4xbf16, #tpu.memory_space<vmem>>, vector<1x8x4xbf16>
    %17 = vector.shape_cast %16 : vector<1x8x4xbf16> to vector<8x4xbf16>
    %cst_23 = arith.constant dense<0.000000e+00> : vector<8x128xf32>
    %18 = tpu.matmul %17, %15, %cst_23 {dimension_numbers = #tpu.dot_dimension_numbers<[1], [0], [0], [1], [0, 0, 1, 1], [], []>} : vector<8x4xbf16>, vector<4x128xbf16>, vector<8x128xf32> -> vector<8x128xf32>
    %19 = arith.addf %13, %18 : vector<8x128xf32>
    %c0_i32_24 = arith.constant 0 : i32
    %20 = arith.cmpi ne, %arg1, %c0_i32_24 : i32
    %21 = arith.extui %20 : i1 to i32
    %c0_i32_25 = arith.constant 0 : i32
    %22 = arith.cmpi ne, %21, %c0_i32_25 : i32
    scf.if %22 {
      %c0_90 = arith.constant 0 : index
      %c0_91 = arith.constant 0 : index
      %c0_92 = arith.constant 0 : index
      %72 = vector.load %arg4[%c0_90, %c0_91, %c0_92] : memref<1x8x128xf32, #tpu.memory_space<vmem>>, vector<1x8x128xf32>
      %73 = vector.shape_cast %72 : vector<1x8x128xf32> to vector<8x128xf32>
      %74 = arith.addf %73, %19 : vector<8x128xf32>
      %c0_93 = arith.constant 0 : index
      %c0_94 = arith.constant 0 : index
      %c0_95 = arith.constant 0 : index
      %75 = vector.load %arg4[%c0_93, %c0_94, %c0_95] : memref<1x8x128xf32, #tpu.memory_space<vmem>>, vector<1x8x128xf32>
      %76 = vector.shape_cast %75 : vector<1x8x128xf32> to vector<8x128xf32>
      %77 = vector.shape_cast %74 : vector<8x128xf32> to vector<1x8x128xf32>
      tpu.vector_store %arg4[%c0_93, %c0_94, %c0_95], %77 {strides = array<i32>} : memref<1x8x128xf32, #tpu.memory_space<vmem>>, vector<1x8x128xf32>,
      %c0_96 = arith.constant 0 : index
      %c0_97 = arith.constant 0 : index
      %c0_98 = arith.constant 0 : index
      %78 = vector.load %arg5[%c0_96, %c0_97, %c0_98] : memref<1x8x128xf32, #tpu.memory_space<vmem>>, vector<1x8x128xf32>
      %79 = vector.shape_cast %78 : vector<1x8x128xf32> to vector<8x128xf32>
      %80 = arith.mulf %19, %19 : vector<8x128xf32>
      %81 = arith.addf %79, %80 : vector<8x128xf32>
      %c0_99 = arith.constant 0 : index
      %c0_100 = arith.constant 0 : index
      %c0_101 = arith.constant 0 : index
      %82 = vector.load %arg5[%c0_99, %c0_100, %c0_101] : memref<1x8x128xf32, #tpu.memory_space<vmem>>, vector<1x8x128xf32>
      %83 = vector.shape_cast %82 : vector<1x8x128xf32> to vector<8x128xf32>
      %84 = vector.shape_cast %81 : vector<8x128xf32> to vector<1x8x128xf32>
      tpu.vector_store %arg5[%c0_99, %c0_100, %c0_101], %84 {strides = array<i32>} : memref<1x8x128xf32, #tpu.memory_space<vmem>>, vector<1x8x128xf32>,
    } else {
    }
    %c0_i32_26 = arith.constant 0 : i32
    %23 = arith.cmpi eq, %arg1, %c0_i32_26 : i32
    %24 = arith.extui %23 : i1 to i32
    %c0_i32_27 = arith.constant 0 : i32
    %25 = arith.cmpi ne, %24, %c0_i32_27 : i32
    scf.if %25 {
      %72 = tpu.iota {dimensions = array<i32: 1>} : vector<8x128xi32>
      %c128_i32 = arith.constant 128 : i32
      %73 = arith.muli %arg1, %c128_i32 : i32
      %74 = vector.broadcast %73 : i32 to vector<8x128xi32>
      %75 = arith.addi %74, %72 : vector<8x128xi32>
      %c3_i32 = arith.constant 3 : i32
      %76 = vector.broadcast %c3_i32 : i32 to vector<8x128xi32>
      %77 = arith.muli %75, %76 : vector<8x128xi32>
      %c0_i32_90 = arith.constant 0 : i32
      %78 = vector.broadcast %c0_i32_90 : i32 to vector<8x128xi32>
      %79 = arith.addi %77, %78 : vector<8x128xi32>
      %c14_i32 = arith.constant 14 : i32
      %80 = vector.broadcast %c14_i32 : i32 to vector<8x128xi32>
      %81 = arith.cmpi slt, %79, %80 : vector<8x128xi32>
      %cst_91 = arith.constant 0.000000e+00 : f32
      %82 = vector.broadcast %cst_91 : f32 to vector<8x128xf32>
      %83 = arith.select %81, %19, %82 : vector<8x128xi1>, vector<8x128xf32>
      %c0_92 = arith.constant 0 : index
      %c0_93 = arith.constant 0 : index
      %c0_94 = arith.constant 0 : index
      %84 = vector.load %arg4[%c0_92, %c0_93, %c0_94] : memref<1x8x128xf32, #tpu.memory_space<vmem>>, vector<1x8x128xf32>
      %85 = vector.shape_cast %84 : vector<1x8x128xf32> to vector<8x128xf32>
      %86 = arith.addf %85, %83 : vector<8x128xf32>
      %c0_95 = arith.constant 0 : index
      %c0_96 = arith.constant 0 : index
      %c0_97 = arith.constant 0 : index
      %87 = vector.load %arg4[%c0_95, %c0_96, %c0_97] : memref<1x8x128xf32, #tpu.memory_space<vmem>>, vector<1x8x128xf32>
      %88 = vector.shape_cast %87 : vector<1x8x128xf32> to vector<8x128xf32>
      %89 = vector.shape_cast %86 : vector<8x128xf32> to vector<1x8x128xf32>
      tpu.vector_store %arg4[%c0_95, %c0_96, %c0_97], %89 {strides = array<i32>} : memref<1x8x128xf32, #tpu.memory_space<vmem>>, vector<1x8x128xf32>,
      %c0_98 = arith.constant 0 : index
      %c0_99 = arith.constant 0 : index
      %c0_100 = arith.constant 0 : index
      %90 = vector.load %arg5[%c0_98, %c0_99, %c0_100] : memref<1x8x128xf32, #tpu.memory_space<vmem>>, vector<1x8x128xf32>
      %91 = vector.shape_cast %90 : vector<1x8x128xf32> to vector<8x128xf32>
      %92 = arith.mulf %83, %19 : vector<8x128xf32>
      %93 = arith.addf %91, %92 : vector<8x128xf32>
      %c0_101 = arith.constant 0 : index
      %c0_102 = arith.constant 0 : index
      %c0_103 = arith.constant 0 : index
      %94 = vector.load %arg5[%c0_101, %c0_102, %c0_103] : memref<1x8x128xf32, #tpu.memory_space<vmem>>, vector<1x8x128xf32>
      %95 = vector.shape_cast %94 : vector<1x8x128xf32> to vector<8x128xf32>
      %96 = vector.shape_cast %93 : vector<8x128xf32> to vector<1x8x128xf32>
      tpu.vector_store %arg5[%c0_101, %c0_102, %c0_103], %96 {strides = array<i32>} : memref<1x8x128xf32, #tpu.memory_space<vmem>>, vector<1x8x128xf32>,
    } else {
    }
    %c0_28 = arith.constant 0 : index
    %c0_29 = arith.constant 0 : index
    %c1_30 = arith.constant 1 : index
    %c0_31 = arith.constant 0 : index
    %c0_32 = arith.constant 0 : index
    %26 = vector.load %arg2[%c0_28, %c0_29, %c1_30, %c0_31, %c0_32] : memref<1x1x3x4x129xbf16, #tpu.memory_space<vmem>>, vector<1x1x1x4x128xbf16>
    %27 = vector.shape_cast %26 : vector<1x1x1x4x128xbf16> to vector<4x128xbf16>
    %c0_33 = arith.constant 0 : index
    %c0_34 = arith.constant 0 : index
    %c0_35 = arith.constant 0 : index
    %28 = vector.load %arg3[%c0_33, %c0_34, %c0_35] : memref<3x8x4xbf16, #tpu.memory_space<vmem>>, vector<1x8x4xbf16>
    %29 = vector.shape_cast %28 : vector<1x8x4xbf16> to vector<8x4xbf16>
    %cst_36 = arith.constant dense<0.000000e+00> : vector<8x128xf32>
    %30 = tpu.matmul %29, %27, %cst_36 {dimension_numbers = #tpu.dot_dimension_numbers<[1], [0], [0], [1], [0, 0, 1, 1], [], []>} : vector<8x4xbf16>, vector<4x128xbf16>, vector<8x128xf32> -> vector<8x128xf32>
    %c0_37 = arith.constant 0 : index
    %c0_38 = arith.constant 0 : index
    %c2_39 = arith.constant 2 : index
    %c0_40 = arith.constant 0 : index
    %c0_41 = arith.constant 0 : index
    %31 = vector.load %arg2[%c0_37, %c0_38, %c2_39, %c0_40, %c0_41] : memref<1x1x3x4x129xbf16, #tpu.memory_space<vmem>>, vector<1x1x1x4x128xbf16>
    %32 = vector.shape_cast %31 : vector<1x1x1x4x128xbf16> to vector<4x128xbf16>
    %c1_42 = arith.constant 1 : index
    %c0_43 = arith.constant 0 : index
    %c0_44 = arith.constant 0 : index
    %33 = vector.load %arg3[%c1_42, %c0_43, %c0_44] : memref<3x8x4xbf16, #tpu.memory_space<vmem>>, vector<1x8x4xbf16>
    %34 = vector.shape_cast %33 : vector<1x8x4xbf16> to vector<8x4xbf16>
    %cst_45 = arith.constant dense<0.000000e+00> : vector<8x128xf32>
    %35 = tpu.matmul %34, %32, %cst_45 {dimension_numbers = #tpu.dot_dimension_numbers<[1], [0], [0], [1], [0, 0, 1, 1], [], []>} : vector<8x4xbf16>, vector<4x128xbf16>, vector<8x128xf32> -> vector<8x128xf32>
    %36 = arith.addf %30, %35 : vector<8x128xf32>
    %c0_46 = arith.constant 0 : index
    %c0_47 = arith.constant 0 : index
    %c0_48 = arith.constant 0 : index
    %c0_49 = arith.constant 0 : index
    %c1_50 = arith.constant 1 : index
    %37 = vector.load %arg2[%c0_46, %c0_47, %c0_48, %c0_49, %c1_50] : memref<1x1x3x4x129xbf16, #tpu.memory_space<vmem>>, vector<1x1x1x4x128xbf16>
    %38 = vector.shape_cast %37 : vector<1x1x1x4x128xbf16> to vector<4x128xbf16>
    %c2_51 = arith.constant 2 : index
    %c0_52 = arith.constant 0 : index
    %c0_53 = arith.constant 0 : index
    %39 = vector.load %arg3[%c2_51, %c0_52, %c0_53] : memref<3x8x4xbf16, #tpu.memory_space<vmem>>, vector<1x8x4xbf16>
    %40 = vector.shape_cast %39 : vector<1x8x4xbf16> to vector<8x4xbf16>
    %cst_54 = arith.constant dense<0.000000e+00> : vector<8x128xf32>
    %41 = tpu.matmul %40, %38, %cst_54 {dimension_numbers = #tpu.dot_dimension_numbers<[1], [0], [0], [1], [0, 0, 1, 1], [], []>} : vector<8x4xbf16>, vector<4x128xbf16>, vector<8x128xf32> -> vector<8x128xf32>
    %42 = arith.addf %36, %41 : vector<8x128xf32>
    %c0_i32_55 = arith.constant 0 : i32
    %43 = arith.cmpi ne, %arg1, %c0_i32_55 : i32
    %44 = arith.extui %43 : i1 to i32
    %c0_i32_56 = arith.constant 0 : i32
    %45 = arith.cmpi ne, %44, %c0_i32_56 : i32
    scf.if %45 {
      %c0_90 = arith.constant 0 : index
      %c0_91 = arith.constant 0 : index
      %c0_92 = arith.constant 0 : index
      %72 = vector.load %arg4[%c0_90, %c0_91, %c0_92] : memref<1x8x128xf32, #tpu.memory_space<vmem>>, vector<1x8x128xf32>
      %73 = vector.shape_cast %72 : vector<1x8x128xf32> to vector<8x128xf32>
      %74 = arith.addf %73, %42 : vector<8x128xf32>
      %c0_93 = arith.constant 0 : index
      %c0_94 = arith.constant 0 : index
      %c0_95 = arith.constant 0 : index
      %75 = vector.load %arg4[%c0_93, %c0_94, %c0_95] : memref<1x8x128xf32, #tpu.memory_space<vmem>>, vector<1x8x128xf32>
      %76 = vector.shape_cast %75 : vector<1x8x128xf32> to vector<8x128xf32>
      %77 = vector.shape_cast %74 : vector<8x128xf32> to vector<1x8x128xf32>
      tpu.vector_store %arg4[%c0_93, %c0_94, %c0_95], %77 {strides = array<i32>} : memref<1x8x128xf32, #tpu.memory_space<vmem>>, vector<1x8x128xf32>,
      %c0_96 = arith.constant 0 : index
      %c0_97 = arith.constant 0 : index
      %c0_98 = arith.constant 0 : index
      %78 = vector.load %arg5[%c0_96, %c0_97, %c0_98] : memref<1x8x128xf32, #tpu.memory_space<vmem>>, vector<1x8x128xf32>
      %79 = vector.shape_cast %78 : vector<1x8x128xf32> to vector<8x128xf32>
      %80 = arith.mulf %42, %42 : vector<8x128xf32>
      %81 = arith.addf %79, %80 : vector<8x128xf32>
      %c0_99 = arith.constant 0 : index
      %c0_100 = arith.constant 0 : index
      %c0_101 = arith.constant 0 : index
      %82 = vector.load %arg5[%c0_99, %c0_100, %c0_101] : memref<1x8x128xf32, #tpu.memory_space<vmem>>, vector<1x8x128xf32>
      %83 = vector.shape_cast %82 : vector<1x8x128xf32> to vector<8x128xf32>
      %84 = vector.shape_cast %81 : vector<8x128xf32> to vector<1x8x128xf32>
      tpu.vector_store %arg5[%c0_99, %c0_100, %c0_101], %84 {strides = array<i32>} : memref<1x8x128xf32, #tpu.memory_space<vmem>>, vector<1x8x128xf32>,
    } else {
    }
    %c0_i32_57 = arith.constant 0 : i32
    %46 = arith.cmpi eq, %arg1, %c0_i32_57 : i32
    %47 = arith.extui %46 : i1 to i32
    %c0_i32_58 = arith.constant 0 : i32
    %48 = arith.cmpi ne, %47, %c0_i32_58 : i32
    scf.if %48 {
      %72 = tpu.iota {dimensions = array<i32: 1>} : vector<8x128xi32>
      %c128_i32 = arith.constant 128 : i32
      %73 = arith.muli %arg1, %c128_i32 : i32
      %74 = vector.broadcast %73 : i32 to vector<8x128xi32>
      %75 = arith.addi %74, %72 : vector<8x128xi32>
      %c3_i32 = arith.constant 3 : i32
      %76 = vector.broadcast %c3_i32 : i32 to vector<8x128xi32>
      %77 = arith.muli %75, %76 : vector<8x128xi32>
      %c1_i32 = arith.constant 1 : i32
      %78 = vector.broadcast %c1_i32 : i32 to vector<8x128xi32>
      %79 = arith.addi %77, %78 : vector<8x128xi32>
      %c14_i32 = arith.constant 14 : i32
      %80 = vector.broadcast %c14_i32 : i32 to vector<8x128xi32>
      %81 = arith.cmpi slt, %79, %80 : vector<8x128xi32>
      %cst_90 = arith.constant 0.000000e+00 : f32
      %82 = vector.broadcast %cst_90 : f32 to vector<8x128xf32>
      %83 = arith.select %81, %42, %82 : vector<8x128xi1>, vector<8x128xf32>
      %c0_91 = arith.constant 0 : index
      %c0_92 = arith.constant 0 : index
      %c0_93 = arith.constant 0 : index
      %84 = vector.load %arg4[%c0_91, %c0_92, %c0_93] : memref<1x8x128xf32, #tpu.memory_space<vmem>>, vector<1x8x128xf32>
      %85 = vector.shape_cast %84 : vector<1x8x128xf32> to vector<8x128xf32>
      %86 = arith.addf %85, %83 : vector<8x128xf32>
      %c0_94 = arith.constant 0 : index
      %c0_95 = arith.constant 0 : index
      %c0_96 = arith.constant 0 : index
      %87 = vector.load %arg4[%c0_94, %c0_95, %c0_96] : memref<1x8x128xf32, #tpu.memory_space<vmem>>, vector<1x8x128xf32>
      %88 = vector.shape_cast %87 : vector<1x8x128xf32> to vector<8x128xf32>
      %89 = vector.shape_cast %86 : vector<8x128xf32> to vector<1x8x128xf32>
      tpu.vector_store %arg4[%c0_94, %c0_95, %c0_96], %89 {strides = array<i32>} : memref<1x8x128xf32, #tpu.memory_space<vmem>>, vector<1x8x128xf32>,
      %c0_97 = arith.constant 0 : index
      %c0_98 = arith.constant 0 : index
      %c0_99 = arith.constant 0 : index
      %90 = vector.load %arg5[%c0_97, %c0_98, %c0_99] : memref<1x8x128xf32, #tpu.memory_space<vmem>>, vector<1x8x128xf32>
      %91 = vector.shape_cast %90 : vector<1x8x128xf32> to vector<8x128xf32>
      %92 = arith.mulf %83, %42 : vector<8x128xf32>
      %93 = arith.addf %91, %92 : vector<8x128xf32>
      %c0_100 = arith.constant 0 : index
      %c0_101 = arith.constant 0 : index
      %c0_102 = arith.constant 0 : index
      %94 = vector.load %arg5[%c0_100, %c0_101, %c0_102] : memref<1x8x128xf32, #tpu.memory_space<vmem>>, vector<1x8x128xf32>
      %95 = vector.shape_cast %94 : vector<1x8x128xf32> to vector<8x128xf32>
      %96 = vector.shape_cast %93 : vector<8x128xf32> to vector<1x8x128xf32>
      tpu.vector_store %arg5[%c0_100, %c0_101, %c0_102], %96 {strides = array<i32>} : memref<1x8x128xf32, #tpu.memory_space<vmem>>, vector<1x8x128xf32>,
    } else {
    }
    %c0_59 = arith.constant 0 : index
    %c0_60 = arith.constant 0 : index
    %c2_61 = arith.constant 2 : index
    %c0_62 = arith.constant 0 : index
    %c0_63 = arith.constant 0 : index
    %49 = vector.load %arg2[%c0_59, %c0_60, %c2_61, %c0_62, %c0_63] : memref<1x1x3x4x129xbf16, #tpu.memory_space<vmem>>, vector<1x1x1x4x128xbf16>
    %50 = vector.shape_cast %49 : vector<1x1x1x4x128xbf16> to vector<4x128xbf16>
    %c0_64 = arith.constant 0 : index
    %c0_65 = arith.constant 0 : index
    %c0_66 = arith.constant 0 : index
    %51 = vector.load %arg3[%c0_64, %c0_65, %c0_66] : memref<3x8x4xbf16, #tpu.memory_space<vmem>>, vector<1x8x4xbf16>
    %52 = vector.shape_cast %51 : vector<1x8x4xbf16> to vector<8x4xbf16>
    %cst_67 = arith.constant dense<0.000000e+00> : vector<8x128xf32>
    %53 = tpu.matmul %52, %50, %cst_67 {dimension_numbers = #tpu.dot_dimension_numbers<[1], [0], [0], [1], [0, 0, 1, 1], [], []>} : vector<8x4xbf16>, vector<4x128xbf16>, vector<8x128xf32> -> vector<8x128xf32>
    %c0_68 = arith.constant 0 : index
    %c0_69 = arith.constant 0 : index
    %c0_70 = arith.constant 0 : index
    %c0_71 = arith.constant 0 : index
    %c1_72 = arith.constant 1 : index
    %54 = vector.load %arg2[%c0_68, %c0_69, %c0_70, %c0_71, %c1_72] : memref<1x1x3x4x129xbf16, #tpu.memory_space<vmem>>, vector<1x1x1x4x128xbf16>
    %55 = vector.shape_cast %54 : vector<1x1x1x4x128xbf16> to vector<4x128xbf16>
    %c1_73 = arith.constant 1 : index
    %c0_74 = arith.constant 0 : index
    %c0_75 = arith.constant 0 : index
    %56 = vector.load %arg3[%c1_73, %c0_74, %c0_75] : memref<3x8x4xbf16, #tpu.memory_space<vmem>>, vector<1x8x4xbf16>
    %57 = vector.shape_cast %56 : vector<1x8x4xbf16> to vector<8x4xbf16>
    %cst_76 = arith.constant dense<0.000000e+00> : vector<8x128xf32>
    %58 = tpu.matmul %57, %55, %cst_76 {dimension_numbers = #tpu.dot_dimension_numbers<[1], [0], [0], [1], [0, 0, 1, 1], [], []>} : vector<8x4xbf16>, vector<4x128xbf16>, vector<8x128xf32> -> vector<8x128xf32>
    %59 = arith.addf %53, %58 : vector<8x128xf32>
    %c0_77 = arith.constant 0 : index
    %c0_78 = arith.constant 0 : index
    %c1_79 = arith.constant 1 : index
    %c0_80 = arith.constant 0 : index
    %c1_81 = arith.constant 1 : index
    %60 = vector.load %arg2[%c0_77, %c0_78, %c1_79, %c0_80, %c1_81] : memref<1x1x3x4x129xbf16, #tpu.memory_space<vmem>>, vector<1x1x1x4x128xbf16>
    %61 = vector.shape_cast %60 : vector<1x1x1x4x128xbf16> to vector<4x128xbf16>
    %c2_82 = arith.constant 2 : index
    %c0_83 = arith.constant 0 : index
    %c0_84 = arith.constant 0 : index
    %62 = vector.load %arg3[%c2_82, %c0_83, %c0_84] : memref<3x8x4xbf16, #tpu.memory_space<vmem>>, vector<1x8x4xbf16>
    %63 = vector.shape_cast %62 : vector<1x8x4xbf16> to vector<8x4xbf16>
    %cst_85 = arith.constant dense<0.000000e+00> : vector<8x128xf32>
    %64 = tpu.matmul %63, %61, %cst_85 {dimension_numbers = #tpu.dot_dimension_numbers<[1], [0], [0], [1], [0, 0, 1, 1], [], []>} : vector<8x4xbf16>, vector<4x128xbf16>, vector<8x128xf32> -> vector<8x128xf32>
    %65 = arith.addf %59, %64 : vector<8x128xf32>
    %c0_i32_86 = arith.constant 0 : i32
    %66 = arith.cmpi ne, %arg1, %c0_i32_86 : i32
    %67 = arith.extui %66 : i1 to i32
    %c0_i32_87 = arith.constant 0 : i32
    %68 = arith.cmpi ne, %67, %c0_i32_87 : i32
    scf.if %68 {
      %c0_90 = arith.constant 0 : index
      %c0_91 = arith.constant 0 : index
      %c0_92 = arith.constant 0 : index
      %72 = vector.load %arg4[%c0_90, %c0_91, %c0_92] : memref<1x8x128xf32, #tpu.memory_space<vmem>>, vector<1x8x128xf32>
      %73 = vector.shape_cast %72 : vector<1x8x128xf32> to vector<8x128xf32>
      %74 = arith.addf %73, %65 : vector<8x128xf32>
      %c0_93 = arith.constant 0 : index
      %c0_94 = arith.constant 0 : index
      %c0_95 = arith.constant 0 : index
      %75 = vector.load %arg4[%c0_93, %c0_94, %c0_95] : memref<1x8x128xf32, #tpu.memory_space<vmem>>, vector<1x8x128xf32>
      %76 = vector.shape_cast %75 : vector<1x8x128xf32> to vector<8x128xf32>
      %77 = vector.shape_cast %74 : vector<8x128xf32> to vector<1x8x128xf32>
      tpu.vector_store %arg4[%c0_93, %c0_94, %c0_95], %77 {strides = array<i32>} : memref<1x8x128xf32, #tpu.memory_space<vmem>>, vector<1x8x128xf32>,
      %c0_96 = arith.constant 0 : index
      %c0_97 = arith.constant 0 : index
      %c0_98 = arith.constant 0 : index
      %78 = vector.load %arg5[%c0_96, %c0_97, %c0_98] : memref<1x8x128xf32, #tpu.memory_space<vmem>>, vector<1x8x128xf32>
      %79 = vector.shape_cast %78 : vector<1x8x128xf32> to vector<8x128xf32>
      %80 = arith.mulf %65, %65 : vector<8x128xf32>
      %81 = arith.addf %79, %80 : vector<8x128xf32>
      %c0_99 = arith.constant 0 : index
      %c0_100 = arith.constant 0 : index
      %c0_101 = arith.constant 0 : index
      %82 = vector.load %arg5[%c0_99, %c0_100, %c0_101] : memref<1x8x128xf32, #tpu.memory_space<vmem>>, vector<1x8x128xf32>
      %83 = vector.shape_cast %82 : vector<1x8x128xf32> to vector<8x128xf32>
      %84 = vector.shape_cast %81 : vector<8x128xf32> to vector<1x8x128xf32>
      tpu.vector_store %arg5[%c0_99, %c0_100, %c0_101], %84 {strides = array<i32>} : memref<1x8x128xf32, #tpu.memory_space<vmem>>, vector<1x8x128xf32>,
    } else {
    }
    %c0_i32_88 = arith.constant 0 : i32
    %69 = arith.cmpi eq, %arg1, %c0_i32_88 : i32
    %70 = arith.extui %69 : i1 to i32
    %c0_i32_89 = arith.constant 0 : i32
    %71 = arith.cmpi ne, %70, %c0_i32_89 : i32
    scf.if %71 {
      %72 = tpu.iota {dimensions = array<i32: 1>} : vector<8x128xi32>
      %c128_i32 = arith.constant 128 : i32
      %73 = arith.muli %arg1, %c128_i32 : i32
      %74 = vector.broadcast %73 : i32 to vector<8x128xi32>
      %75 = arith.addi %74, %72 : vector<8x128xi32>
      %c3_i32 = arith.constant 3 : i32
      %76 = vector.broadcast %c3_i32 : i32 to vector<8x128xi32>
      %77 = arith.muli %75, %76 : vector<8x128xi32>
      %c2_i32 = arith.constant 2 : i32
      %78 = vector.broadcast %c2_i32 : i32 to vector<8x128xi32>
      %79 = arith.addi %77, %78 : vector<8x128xi32>
      %c14_i32 = arith.constant 14 : i32
      %80 = vector.broadcast %c14_i32 : i32 to vector<8x128xi32>
      %81 = arith.cmpi slt, %79, %80 : vector<8x128xi32>
      %cst_90 = arith.constant 0.000000e+00 : f32
      %82 = vector.broadcast %cst_90 : f32 to vector<8x128xf32>
      %83 = arith.select %81, %65, %82 : vector<8x128xi1>, vector<8x128xf32>
      %c0_91 = arith.constant 0 : index
      %c0_92 = arith.constant 0 : index
      %c0_93 = arith.constant 0 : index
      %84 = vector.load %arg4[%c0_91, %c0_92, %c0_93] : memref<1x8x128xf32, #tpu.memory_space<vmem>>, vector<1x8x128xf32>
      %85 = vector.shape_cast %84 : vector<1x8x128xf32> to vector<8x128xf32>
      %86 = arith.addf %85, %83 : vector<8x128xf32>
      %c0_94 = arith.constant 0 : index
      %c0_95 = arith.constant 0 : index
      %c0_96 = arith.constant 0 : index
      %87 = vector.load %arg4[%c0_94, %c0_95, %c0_96] : memref<1x8x128xf32, #tpu.memory_space<vmem>>, vector<1x8x128xf32>
      %88 = vector.shape_cast %87 : vector<1x8x128xf32> to vector<8x128xf32>
      %89 = vector.shape_cast %86 : vector<8x128xf32> to vector<1x8x128xf32>
      tpu.vector_store %arg4[%c0_94, %c0_95, %c0_96], %89 {strides = array<i32>} : memref<1x8x128xf32, #tpu.memory_space<vmem>>, vector<1x8x128xf32>,
      %c0_97 = arith.constant 0 : index
      %c0_98 = arith.constant 0 : index
      %c0_99 = arith.constant 0 : index
      %90 = vector.load %arg5[%c0_97, %c0_98, %c0_99] : memref<1x8x128xf32, #tpu.memory_space<vmem>>, vector<1x8x128xf32>
      %91 = vector.shape_cast %90 : vector<1x8x128xf32> to vector<8x128xf32>
      %92 = arith.mulf %83, %65 : vector<8x128xf32>
      %93 = arith.addf %91, %92 : vector<8x128xf32>
      %c0_100 = arith.constant 0 : index
      %c0_101 = arith.constant 0 : index
      %c0_102 = arith.constant 0 : index
      %94 = vector.load %arg5[%c0_100, %c0_101, %c0_102] : memref<1x8x128xf32, #tpu.memory_space<vmem>>, vector<1x8x128xf32>
      %95 = vector.shape_cast %94 : vector<1x8x128xf32> to vector<8x128xf32>
      %96 = vector.shape_cast %93 : vector<8x128xf32> to vector<1x8x128xf32>
      tpu.vector_store %arg5[%c0_100, %c0_101, %c0_102], %96 {strides = array<i32>} : memref<1x8x128xf32, #tpu.memory_space<vmem>>, vector<1x8x128xf32>,
    } else {
    }
    return
  }
  func.func @transform_0(%arg0: i32, %arg1: i32) -> (i32, i32, i32, i32, i32) {
    %c0_i32 = arith.constant 0 : i32
    %c0_i32_0 = arith.constant 0 : i32
    %c0_i32_1 = arith.constant 0 : i32
    %c0_i32_2 = arith.constant 0 : i32
    return %arg0, %arg1, %c0_i32, %c0_i32_0, %c0_i32_1 : i32, i32, i32, i32, i32
  }
  func.func @transform_1(%arg0: i32, %arg1: i32) -> (i32, i32, i32) {
    %c0_i32 = arith.constant 0 : i32
    %c0_i32_0 = arith.constant 0 : i32
    %c0_i32_1 = arith.constant 0 : i32
    %c0_i32_2 = arith.constant 0 : i32
    return %c0_i32, %c0_i32_0, %c0_i32_1 : i32, i32, i32
  }
  func.func @transform_2(%arg0: i32, %arg1: i32) -> (i32, i32, i32) {
    %c0_i32 = arith.constant 0 : i32
    %c0_i32_0 = arith.constant 0 : i32
    %c0_i32_1 = arith.constant 0 : i32
    return %arg0, %c0_i32, %c0_i32_0 : i32, i32, i32
  }
  func.func @transform_3(%arg0: i32, %arg1: i32) -> (i32, i32, i32) {
    %c0_i32 = arith.constant 0 : i32
    %c0_i32_0 = arith.constant 0 : i32
    %c0_i32_1 = arith.constant 0 : i32
    return %arg0, %c0_i32, %c0_i32_0 : i32, i32, i32
  }
}

</mosaic_0001>

<llo_original>
// kernel: tpu_custom_call.1
$region0: #{tpu_custom_call.1}
  #allocation0 [shape = 'u32[]', space=smem, size = 0x4, offset = 0x4, fixed_abs, tag = 'smem constant byte address 0x4 - core index']
  #allocation1 [shape = 'u32[144,128]{1,0:T(1,128)}', space=vmem, size = 0x12000, scoped, tag = 'internal scratch']
  %s0 = inlined_call_operand.hbm [shape: bf16[2,1,3,4,129], index: 0, kind: input, shape index: {}]
  %s1 = inlined_call_operand.vmem [shape: bf16[3,8,4], index: 1, kind: input, shape index: {}]
  %s2 = inlined_call_operand.hbm [shape: f32[2,8,128], index: 2, kind: output, shape index: {0}]
  %s3 = inlined_call_operand.hbm [shape: f32[2,8,128], index: 3, kind: output, shape index: {1}]
  %4 = xla_tuple %s2, %s3
  %s5 = sld [smem:[#allocation0]]
  $region81: #{tpu_custom_call.1} parent=0
    _
  %s7 = ssub.s32 1, %s5
  %s8 = scalar_select 0, %s7, %s5
  $region1: #{tpu_custom_call.1} parent=0
    #allocation2 [shape = 'u8[12288]{0}', space=vmem, size = 0x3000, scoped, tag = 'input window, operand 0']
    #allocation3 [shape = 's32[2]{0}', space=sflag, size = 0x8, scoped, tag = 'scoped memory for tpu_custom_call.1']
    #allocation4 [shape = 's32[2]{0}', space=sflag, size = 0x8, scoped, tag = 'scoped memory for tpu_custom_call.1']
    #allocation5 [shape = 'u8[8192]{0}', space=vmem, size = 0x2000, scoped, tag = 'output window, operand 0']
    #allocation6 [shape = 'u8[8192]{0}', space=vmem, size = 0x2000, scoped, tag = 'output window, operand 1']
    #allocation7 [shape = 's32[2]{0}', space=sflag, size = 0x8, scoped, tag = 'scoped memory for tpu_custom_call.1']
    %9 = vsyncpa [#allocation3], 0
    %s10 = scalar_lea.sflag [#allocation3], 1
    %11 = vsyncpa %s10, 0
    %12 = vsyncpa [#allocation4], 0
    %s13 = scalar_lea.sflag [#allocation4], 1
    %14 = vsyncpa %s13, 0
    %15 = vsyncpa [#allocation7], 0
    %s16 = scalar_lea.sflag [#allocation7], 1
    %17 = vsyncpa %s16, 0
    loop: start=0, step=1, limit=4
    $region2: #{tpu_custom_call.1} parent=1 // loop_pre_header
      _
    $region3: #{tpu_custom_call.1} parent=1 // loop_header
      %s19 = sphi 0, %s23
      %p20 = scmp.ge.s32.totalorder %s19, 4
      %s26 = sphi 0, %s38
      %s27 = sphi 0, %s34
      %s28 = sphi 0, %s26
      %s29 = sphi 0, %s27
      %s30 = sphi 0, %s28
      %s31 = sphi 0, %s29
      %s43 = sphi 0, %s45
      %s46 = sphi 0, %s43
      %s47 = sphi 0, %s46
      %s63 = sphi 0, %s47
      %s67 = sphi 0, %s67
      %s69 = sphi 0, %s67
      %s70 = sphi 0, %s69
      %s84 = sphi 0, %s70
      %s90 = sphi 0, %s92
      %s93 = sphi 0, %s90
      %s94 = sphi 0, %s93
      %s110 = sphi 0, %s94
      %s116 = sphi 0, %s118
      %s119 = sphi 0, %s116
      %s120 = sphi 0, %s119
      %s136 = sphi 0, %s120
    $region4: #{tpu_custom_call.1} parent=1 // loop_header_branch
      %22 = sbr.rel (%p20) target = $region8
    $region5: #{tpu_custom_call.1} parent=1 // loop_body
      %s24 = ssub.s32 %s19, 1
      %s25 = ssub.s32 %s19, 2
      %s32 = sadd.s32 1, %s27
      %p33 = scmp.ge.s32.totalorder %s32, 1
      %s34 = scalar_select %p33, 0, %s32
      %s35 = sadd.s32 1, %s26
      %s36 = scalar_select %p33, %s35, %s26
      %p37 = scmp.ge.s32.totalorder %s36, 2
      %s38 = scalar_select %p37, 0, %s36
      %s39 = ssub.s32 %s26, %s38
      %s40 = ssub.s32 %s27, %s34
      %s41 = sor.u32 %s39, %s40
      %p42 = scmp.eq.s32.totalorder %s41, 0
      %s44 = sadd.s32 %s43, 1
      %s45 = scalar_select %p42, %s43, %s44
      %p48 = pneg %p42
      %p49 = scmp.eq.s32.totalorder %s19, 1
      %p50 = por %p48, %p49
      %p51 = scmp.ne.s32.totalorder %s43, %s46
      %p52 = scmp.eq.s32.totalorder %s19, 0
      %p53 = por %p51, %p52
      %p54 = scmp.ne.s32.totalorder %s43, %s46
      %p55 = scmp.eq.s32.totalorder %s24, 1
      %p56 = por %p54, %p55
      %p57 = scmp.ne.s32.totalorder %s46, %s47
      %p58 = scmp.eq.s32.totalorder %s24, 0
      %p59 = por %p57, %p58
      %p60 = scmp.ne.s32.totalorder %s46, %s47
      %p61 = scmp.eq.s32.totalorder %s25, 1
      %p62 = por %p60, %p61
      %p64 = scmp.ne.s32.totalorder %s47, %s63
      %p65 = scmp.eq.s32.totalorder %s25, 0
      %p66 = por %p64, %p65
      %s68 = sadd.s32 %s67, 1
      %p71 = scmp.eq.s32.totalorder %s19, 1
      %p72 = scmp.ne.s32.totalorder %s67, %s69
      %p73 = scmp.eq.s32.totalorder %s19, 0
      %p74 = por %p72, %p73
      %p75 = scmp.ne.s32.totalorder %s67, %s69
      %p76 = scmp.eq.s32.totalorder %s24, 1
      %p77 = por %p75, %p76
      %p78 = scmp.ne.s32.totalorder %s69, %s70
      %p79 = scmp.eq.s32.totalorder %s24, 0
      %p80 = por %p78, %p79
      %p81 = scmp.ne.s32.totalorder %s69, %s70
      %p82 = scmp.eq.s32.totalorder %s25, 1
      %p83 = por %p81, %p82
      %p85 = scmp.ne.s32.totalorder %s70, %s84
      %p86 = scmp.eq.s32.totalorder %s25, 0
      %p87 = por %p85, %p86
      %s88 = ssub.s32 %s26, %s38
      %p89 = scmp.eq.s32.totalorder %s88, 0
      %s91 = sadd.s32 %s90, 1
      %s92 = scalar_select %p89, %s90, %s91
      %p95 = pneg %p89
      %p96 = scmp.eq.s32.totalorder %s19, 1
      %p97 = por %p95, %p96
      %p98 = scmp.ne.s32.totalorder %s90, %s93
      %p99 = scmp.eq.s32.totalorder %s19, 0
      %p100 = por %p98, %p99
      %p101 = scmp.ne.s32.totalorder %s90, %s93
      %p102 = scmp.eq.s32.totalorder %s24, 1
      %p103 = por %p101, %p102
      %p104 = scmp.ne.s32.totalorder %s93, %s94
      %p105 = scmp.eq.s32.totalorder %s24, 0
      %p106 = por %p104, %p105
      %p107 = scmp.ne.s32.totalorder %s93, %s94
      %p108 = scmp.eq.s32.totalorder %s25, 1
      %p109 = por %p107, %p108
      %p111 = scmp.ne.s32.totalorder %s94, %s110
      %p112 = scmp.eq.s32.totalorder %s25, 0
      %p113 = por %p111, %p112
      %s114 = ssub.s32 %s26, %s38
      %p115 = scmp.eq.s32.totalorder %s114, 0
      %s117 = sadd.s32 %s116, 1
      %s118 = scalar_select %p115, %s116, %s117
      %p121 = pneg %p115
      %p122 = scmp.eq.s32.totalorder %s19, 1
      %p123 = por %p121, %p122
      %p124 = scmp.ne.s32.totalorder %s116, %s119
      %p125 = scmp.eq.s32.totalorder %s19, 0
      %p126 = por %p124, %p125
      %p127 = scmp.ne.s32.totalorder %s116, %s119
      %p128 = scmp.eq.s32.totalorder %s24, 1
      %p129 = por %p127, %p128
      %p130 = scmp.ne.s32.totalorder %s119, %s120
      %p131 = scmp.eq.s32.totalorder %s24, 0
      %p132 = por %p130, %p131
      %p133 = scmp.ne.s32.totalorder %s119, %s120
      %p134 = scmp.eq.s32.totalorder %s25, 1
      %p135 = por %p133, %p134
      %p137 = scmp.ne.s32.totalorder %s120, %s136
      %p138 = scmp.eq.s32.totalorder %s25, 0
      %p139 = por %p137, %p138
      %p140 = scmp.le.s32.totalorder 1, %s19
      %p141 = scmp.lt.s32.totalorder %s19, 3
      %p142 = pnand %p140, %p141
      %p143 = pneg %p142
      // Predicated region
      $region9: #{tpu_custom_call.1} parent=5 // pred_check
        _
      $region10: #{tpu_custom_call.1} parent=5 // pred_check_branch
        %145 = sbr.rel (%p142) target = $region12
      $region11: #{tpu_custom_call.1} parent=5 // pred_region
        %s146 = ssub.s32 %s19, 1
        // Predicated region
        $region13: #{tpu_custom_call.1} parent=11 // pred_check
          %p147 = pneg %p80
        $region14: #{tpu_custom_call.1} parent=11 // pred_check_branch
          %149 = sbr.rel (%p147) target = $region16
        $region15: #{tpu_custom_call.1} parent=11 // pred_region
          _
        $region16: #{tpu_custom_call.1} parent=11 // pred_fallthru
          _
      $region12: #{tpu_custom_call.1} parent=5 // pred_fallthru
        _
      %p150 = scmp.lt.s32.totalorder %s19, 2
      // Predicated region
      $region17: #{tpu_custom_call.1} parent=5 // pred_check
        %p151 = pneg %p150
      $region18: #{tpu_custom_call.1} parent=5 // pred_check_branch
        %153 = sbr.rel (%p151) target = $region20
      $region19: #{tpu_custom_call.1} parent=5 // pred_region
        // Predicated region
        $region21: #{tpu_custom_call.1} parent=19 // pred_check
          %p154 = pneg %p53
        $region22: #{tpu_custom_call.1} parent=19 // pred_check_branch
          %156 = sbr.rel (%p154) target = $region24
        $region23: #{tpu_custom_call.1} parent=19 // pred_region
          %s157 = sand.u32 %s43, 1
          %s158 = scalar_lea.sflag [#allocation3], %s157
          %s159 = sand.u32 %s43, 1
          %s160 = smul.addr %s159, 12
          %s161 = scalar_lea.vmem [#allocation2], %s160
          %s163 = ssub.s32 192, 192
          %164 = vsyncadd %s158, %s163
          %s165 = smul.addr %s27, 6
          %s166 = smul.addr %s26, 6
          %s167 = sadd.s32 %s165, %s166
          %s168 = smul.addr %s167, 32
          %s169 = scalar_lea.hbm %s0, %s168
          %s170 = sshll.u32 %s161, 4
          %s171 = int_to_ptr.vmem [resolvable:$true] %s170
          %176 = dma.hbm_to_vmem [thread:$0]  %s169, 192, %s171, %s158, 64, 64, 4
        $region24: #{tpu_custom_call.1} parent=19 // pred_fallthru
          _
      $region20: #{tpu_custom_call.1} parent=5 // pred_fallthru
        _
      %p177 = scmp.le.s32.totalorder 1, %s19
      %p178 = scmp.lt.s32.totalorder %s19, 3
      %p179 = pnand %p177, %p178
      %p180 = pneg %p179
      // Predicated region
      $region25: #{tpu_custom_call.1} parent=5 // pred_check
        _
      $region26: #{tpu_custom_call.1} parent=5 // pred_check_branch
        %182 = sbr.rel (%p179) target = $region28
      $region27: #{tpu_custom_call.1} parent=5 // pred_region
        %s183 = ssub.s32 %s19, 1
        %s184 = sand.u32 %s46, 1
        %s185 = scalar_lea.sflag [#allocation3], %s184
        %s186 = sand.u32 %s46, 1
        %s187 = smul.addr %s186, 12
        %s188 = scalar_lea.vmem [#allocation2], %s187
        // Predicated region
        $region29: #{tpu_custom_call.1} parent=27 // pred_check
          %p189 = pneg %p59
        $region30: #{tpu_custom_call.1} parent=27 // pred_check_branch
          %191 = sbr.rel (%p189) target = $region32
        $region31: #{tpu_custom_call.1} parent=27 // pred_region
          %192 = dma.done %s185, 192
        $region32: #{tpu_custom_call.1} parent=27 // pred_fallthru
          _
        %s193 = sand.u32 %s46, 1
        %s194 = scalar_lea.sflag [#allocation3], %s193
        %s195 = sand.u32 %s46, 1
        %s196 = smul.addr %s195, 12
        %s197 = scalar_lea.vmem [#allocation2], %s196
        %p198 = pneg %p59
        %p199 = pneg %p56
        %p200 = pneg %p80
        %p201 = pneg %p77
        %p202 = pneg %p106
        %p203 = pneg %p103
        %s204 = sand.u32 %s93, 1
        %s205 = scalar_lea.sflag [#allocation4], %s204
        %s206 = sand.u32 %s93, 1
        %s207 = smul.addr %s206, 8
        %s208 = scalar_lea.vmem [#allocation5], %s207
        %p209 = pneg %p132
        %p210 = pneg %p129
        %s211 = sand.u32 %s119, 1
        %s212 = scalar_lea.sflag [#allocation7], %s211
        %s213 = sand.u32 %s119, 1
        %s214 = smul.addr %s213, 8
        %s215 = scalar_lea.vmem [#allocation6], %s214
        %p217 = scmp.eq.s32.totalorder %s29, 0
        // Predicated region
        $region33: #{tpu_custom_call.1} parent=27 // pred_check
          %p218 = pneg %p217
        $region34: #{tpu_custom_call.1} parent=27 // pred_check_branch
          %220 = sbr.rel (%p218) target = $region36
        $region35: #{tpu_custom_call.1} parent=27 // pred_region
          %221 = vst [vmem:[%s208] sm:$0xff] 0.0
          %222 = vst [vmem:[%s215] sm:$0xff] 0.0
        $region36: #{tpu_custom_call.1} parent=27 // pred_fallthru
          _
        %v223 = vld [vmem:[%s188] sm:$0x3]
        %v224 = vld [vmem:[%s1] sm:$0xf]
        %s225 = scalar_lea.vmem %s188, 4 [#allocation2]
        %v226 = vld [vmem:[%s225] sm:$0x3]
        %s227 = scalar_lea.vmem %s1, 4
        %v228 = vld [vmem:[%s227] sm:$0xf]
        %vm229 = vcmask 31744
        %v231 = vsel %vm229, %v228, 0
        %vm233 = vcmask 1041408
        %v235 = vsel %vm233, %v226, 0
        %237 = vmatprep.subr.bf16.mxu0 0
        %238 = vmatpush1.bf16.msra.mxu0 %v235
        %239 = vmatprep.subr.bf16.mxu0 0
        %240 = vmatpush1.bf16.msra.mxu0 0
        %241 = vmatprep.subr.bf16.mxu0 0
        %242 = vmatpush1.bf16.msra.mxu0 0
        %243 = vmatprep.subr.bf16.mxu0 0
        %244 = vmatpush1.bf16.msra.mxu0 0
        %245 = vmatprep.subr.bf16.mxu0 0
        %246 = vmatpush1.bf16.msra.mxu0 0
        %247 = vmatprep.subr.bf16.mxu0 0
        %248 = vmatpush1.bf16.msra.mxu0 0
        %249 = vmatprep.subr.bf16.mxu0 0
        %250 = vmatpush1.bf16.msra.mxu0 0
        %251 = vmatprep.subr.bf16.mxu0 0
        %252 = vmatpush1.bf16.msra.mxu0 0
        %253 = vmatprep.subr.bf16.mxu0 0
        %254 = vmatpush1.bf16.msra.mxu0 0
        %255 = vmatprep.subr.bf16.mxu0 0
        %256 = vmatpush1.bf16.msra.mxu0 0
        %257 = vmatprep.subr.bf16.mxu0 0
        %258 = vmatpush1.bf16.msra.mxu0 0
        %259 = vmatprep.subr.bf16.mxu0 0
        %260 = vmatpush1.bf16.msra.mxu0 0
        %261 = vmatprep.subr.bf16.mxu0 0
        %262 = vmatpush1.bf16.msra.mxu0 0
        %263 = vmatprep.subr.bf16.mxu0 0
        %264 = vmatpush1.bf16.msra.mxu0 0
        %265 = vmatprep.subr.bf16.mxu0 0
        %266 = vmatpush1.bf16.msra.mxu0 0
        %267 = vmatprep.subr.bf16.mxu0 0
        %268 = vmatpush1.bf16.msra.mxu0 0
        %269 = vmatprep.mubr.bf16.mxu0 0
        %270 = vmatmul.mubr.bf16.gmra.mrb[0].mxu0 %v231
        %v271 = vpop.f32.mrb[0].mxu0
        %v272 = vadd.f32 0.0, %v271
        %v273 = vpop.f32.mrb[0].mxu0
        %v274 = vpop.f32.mrb[0].mxu0
        %v275 = vpop.f32.mrb[0].mxu0
        %276 = vdwg.mxu0
        %v278 = vsel %vm229, %v224, 0
        %v281 = vsel %vm233, %v223, 0
        %283 = vmatprep.subr.bf16.mxu0 0
        %284 = vmatpush1.bf16.msra.mxu0 %v281
        %285 = vmatprep.subr.bf16.mxu0 0
        %286 = vmatpush1.bf16.msra.mxu0 0
        %287 = vmatprep.subr.bf16.mxu0 0
        %288 = vmatpush1.bf16.msra.mxu0 0
        %289 = vmatprep.subr.bf16.mxu0 0
        %290 = vmatpush1.bf16.msra.mxu0 0
        %291 = vmatprep.subr.bf16.mxu0 0
        %292 = vmatpush1.bf16.msra.mxu0 0
        %293 = vmatprep.subr.bf16.mxu0 0
        %294 = vmatpush1.bf16.msra.mxu0 0
        %295 = vmatprep.subr.bf16.mxu0 0
        %296 = vmatpush1.bf16.msra.mxu0 0
        %297 = vmatprep.subr.bf16.mxu0 0
        %298 = vmatpush1.bf16.msra.mxu0 0
        %299 = vmatprep.subr.bf16.mxu0 0
        %300 = vmatpush1.bf16.msra.mxu0 0
        %301 = vmatprep.subr.bf16.mxu0 0
        %302 = vmatpush1.bf16.msra.mxu0 0
        %303 = vmatprep.subr.bf16.mxu0 0
        %304 = vmatpush1.bf16.msra.mxu0 0
        %305 = vmatprep.subr.bf16.mxu0 0
        %306 = vmatpush1.bf16.msra.mxu0 0
        %307 = vmatprep.subr.bf16.mxu0 0
        %308 = vmatpush1.bf16.msra.mxu0 0
        %309 = vmatprep.subr.bf16.mxu0 0
        %310 = vmatpush1.bf16.msra.mxu0 0
        %311 = vmatprep.subr.bf16.mxu0 0
        %312 = vmatpush1.bf16.msra.mxu0 0
        %313 = vmatprep.subr.bf16.mxu0 0
        %314 = vmatpush1.bf16.msra.mxu0 0
        %315 = vmatprep.mubr.bf16.mxu0 0
        %316 = vmatmul.mubr.bf16.gmra.mrb[0].mxu0 %v278
        %v317 = vpop.f32.mrb[0].mxu0
        %v318 = vadd.f32 %v272, %v317
        %v319 = vpop.f32.mrb[0].mxu0
        %v320 = vpop.f32.mrb[0].mxu0
        %v321 = vpop.f32.mrb[0].mxu0
        %322 = vdwg.mxu0
        %s323 = scalar_lea.vmem %s188, 8 [#allocation2]
        %v324 = vld [vmem:[%s323] sm:$0x3]
        %s325 = scalar_lea.vmem %s1, 8
        %v326 = vld [vmem:[%s325] sm:$0xf]
        %v328 = vsel %vm229, %v326, 0
        %v331 = vsel %vm233, %v324, 0
        %333 = vmatprep.subr.bf16.mxu0 0
        %334 = vmatpush1.bf16.msra.mxu0 %v331
        %335 = vmatprep.subr.bf16.mxu0 0
        %336 = vmatpush1.bf16.msra.mxu0 0
        %337 = vmatprep.subr.bf16.mxu0 0
        %338 = vmatpush1.bf16.msra.mxu0 0
        %339 = vmatprep.subr.bf16.mxu0 0
        %340 = vmatpush1.bf16.msra.mxu0 0
        %341 = vmatprep.subr.bf16.mxu0 0
        %342 = vmatpush1.bf16.msra.mxu0 0
        %343 = vmatprep.subr.bf16.mxu0 0
        %344 = vmatpush1.bf16.msra.mxu0 0
        %345 = vmatprep.subr.bf16.mxu0 0
        %346 = vmatpush1.bf16.msra.mxu0 0
        %347 = vmatprep.subr.bf16.mxu0 0
        %348 = vmatpush1.bf16.msra.mxu0 0
        %349 = vmatprep.subr.bf16.mxu0 0
        %350 = vmatpush1.bf16.msra.mxu0 0
        %351 = vmatprep.subr.bf16.mxu0 0
        %352 = vmatpush1.bf16.msra.mxu0 0
        %353 = vmatprep.subr.bf16.mxu0 0
        %354 = vmatpush1.bf16.msra.mxu0 0
        %355 = vmatprep.subr.bf16.mxu0 0
        %356 = vmatpush1.bf16.msra.mxu0 0
        %357 = vmatprep.subr.bf16.mxu0 0
        %358 = vmatpush1.bf16.msra.mxu0 0
        %359 = vmatprep.subr.bf16.mxu0 0
        %360 = vmatpush1.bf16.msra.mxu0 0
        %361 = vmatprep.subr.bf16.mxu0 0
        %362 = vmatpush1.bf16.msra.mxu0 0
        %363 = vmatprep.subr.bf16.mxu0 0
        %364 = vmatpush1.bf16.msra.mxu0 0
        %365 = vmatprep.mubr.bf16.mxu0 0
        %366 = vmatmul.mubr.bf16.gmra.mrb[0].mxu0 %v328
        %v367 = vpop.f32.mrb[0].mxu0
        %v368 = vadd.f32 0.0, %v367
        %v369 = vpop.f32.mrb[0].mxu0
        %v370 = vpop.f32.mrb[0].mxu0
        %v371 = vpop.f32.mrb[0].mxu0
        %372 = vdwg.mxu0
        %v373 = vadd.f32 %v318, %v368
        %p374 = scmp.ne.s32.totalorder %s29, 0
        // Predicated region
        $region37: #{tpu_custom_call.1} parent=27 // pred_check
          %p375 = pneg %p374
        $region38: #{tpu_custom_call.1} parent=27 // pred_check_branch
          %377 = sbr.rel (%p375) target = $region40
        $region39: #{tpu_custom_call.1} parent=27 // pred_region
          %v378 = vld [vmem:[%s208] sm:$0xff]
          %v379 = vadd.f32 %v378, %v373
          %380 = vst [vmem:[%s208] sm:$0xff] %v379
          %v381 = vld [vmem:[%s215] sm:$0xff]
          %v382 = vmul.f32 %v373, %v373
          %v383 = vadd.f32 %v381, %v382
          %384 = vst [vmem:[%s215] sm:$0xff] %v383
        $region40: #{tpu_custom_call.1} parent=27 // pred_fallthru
          _
        // Predicated region
        $region41: #{tpu_custom_call.1} parent=27 // pred_check
          %p385 = pneg %p217
        $region42: #{tpu_custom_call.1} parent=27 // pred_check_branch
          %387 = sbr.rel (%p385) target = $region44
        $region43: #{tpu_custom_call.1} parent=27 // pred_region
          %v388 = vlaneseq
          %v389 = vand.u32 %v388, 127
          %s390 = smul.u32 %s29, 128
          %v391 = vstv %s390
          %v392 = vadd.s32 %v391, %v389
          %v393 = vmul.u32 %v392, 3
          %vm394 = vcmp.lt.s32.totalorder %v393, 14
          %v395 = vsel %vm394, %v373, 0.0
          %v396 = vld [vmem:[%s208] sm:$0xff]
          %v397 = vadd.f32 %v396, %v395
          %398 = vst [vmem:[%s208] sm:$0xff] %v397
          %v399 = vld [vmem:[%s215] sm:$0xff]
          %v400 = vmul.f32 %v395, %v373
          %v401 = vadd.f32 %v399, %v400
          %402 = vst [vmem:[%s215] sm:$0xff] %v401
        $region44: #{tpu_custom_call.1} parent=27 // pred_fallthru
          _
        %v403 = vld [vmem:[%s225] sm:$0x3]
        %v404 = vld [vmem:[%s1] sm:$0xf]
        %v405 = vld [vmem:[%s323] sm:$0x3]
        %v406 = vld [vmem:[%s227] sm:$0xf]
        %v408 = vsel %vm229, %v406, 0
        %v411 = vsel %vm233, %v405, 0
        %413 = vmatprep.subr.bf16.mxu0 0
        %414 = vmatpush1.bf16.msra.mxu0 %v411
        %415 = vmatprep.subr.bf16.mxu0 0
        %416 = vmatpush1.bf16.msra.mxu0 0
        %417 = vmatprep.subr.bf16.mxu0 0
        %418 = vmatpush1.bf16.msra.mxu0 0
        %419 = vmatprep.subr.bf16.mxu0 0
        %420 = vmatpush1.bf16.msra.mxu0 0
        %421 = vmatprep.subr.bf16.mxu0 0
        %422 = vmatpush1.bf16.msra.mxu0 0
        %423 = vmatprep.subr.bf16.mxu0 0
        %424 = vmatpush1.bf16.msra.mxu0 0
        %425 = vmatprep.subr.bf16.mxu0 0
        %426 = vmatpush1.bf16.msra.mxu0 0
        %427 = vmatprep.subr.bf16.mxu0 0
        %428 = vmatpush1.bf16.msra.mxu0 0
        %429 = vmatprep.subr.bf16.mxu0 0
        %430 = vmatpush1.bf16.msra.mxu0 0
        %431 = vmatprep.subr.bf16.mxu0 0
        %432 = vmatpush1.bf16.msra.mxu0 0
        %433 = vmatprep.subr.bf16.mxu0 0
        %434 = vmatpush1.bf16.msra.mxu0 0
        %435 = vmatprep.subr.bf16.mxu0 0
        %436 = vmatpush1.bf16.msra.mxu0 0
        %437 = vmatprep.subr.bf16.mxu0 0
        %438 = vmatpush1.bf16.msra.mxu0 0
        %439 = vmatprep.subr.bf16.mxu0 0
        %440 = vmatpush1.bf16.msra.mxu0 0
        %441 = vmatprep.subr.bf16.mxu0 0
        %442 = vmatpush1.bf16.msra.mxu0 0
        %443 = vmatprep.subr.bf16.mxu0 0
        %444 = vmatpush1.bf16.msra.mxu0 0
        %445 = vmatprep.mubr.bf16.mxu0 0
        %446 = vmatmul.mubr.bf16.gmra.mrb[0].mxu0 %v408
        %v447 = vpop.f32.mrb[0].mxu0
        %v448 = vadd.f32 0.0, %v447
        %v449 = vpop.f32.mrb[0].mxu0
        %v450 = vpop.f32.mrb[0].mxu0
        %v451 = vpop.f32.mrb[0].mxu0
        %452 = vdwg.mxu0
        %v454 = vsel %vm229, %v404, 0
        %v457 = vsel %vm233, %v403, 0
        %459 = vmatprep.subr.bf16.mxu0 0
        %460 = vmatpush1.bf16.msra.mxu0 %v457
        %461 = vmatprep.subr.bf16.mxu0 0
        %462 = vmatpush1.bf16.msra.mxu0 0
        %463 = vmatprep.subr.bf16.mxu0 0
        %464 = vmatpush1.bf16.msra.mxu0 0
        %465 = vmatprep.subr.bf16.mxu0 0
        %466 = vmatpush1.bf16.msra.mxu0 0
        %467 = vmatprep.subr.bf16.mxu0 0
        %468 = vmatpush1.bf16.msra.mxu0 0
        %469 = vmatprep.subr.bf16.mxu0 0
        %470 = vmatpush1.bf16.msra.mxu0 0
        %471 = vmatprep.subr.bf16.mxu0 0
        %472 = vmatpush1.bf16.msra.mxu0 0
        %473 = vmatprep.subr.bf16.mxu0 0
        %474 = vmatpush1.bf16.msra.mxu0 0
        %475 = vmatprep.subr.bf16.mxu0 0
        %476 = vmatpush1.bf16.msra.mxu0 0
        %477 = vmatprep.subr.bf16.mxu0 0
        %478 = vmatpush1.bf16.msra.mxu0 0
        %479 = vmatprep.subr.bf16.mxu0 0
        %480 = vmatpush1.bf16.msra.mxu0 0
        %481 = vmatprep.subr.bf16.mxu0 0
        %482 = vmatpush1.bf16.msra.mxu0 0
        %483 = vmatprep.subr.bf16.mxu0 0
        %484 = vmatpush1.bf16.msra.mxu0 0
        %485 = vmatprep.subr.bf16.mxu0 0
        %486 = vmatpush1.bf16.msra.mxu0 0
        %487 = vmatprep.subr.bf16.mxu0 0
        %488 = vmatpush1.bf16.msra.mxu0 0
        %489 = vmatprep.subr.bf16.mxu0 0
        %490 = vmatpush1.bf16.msra.mxu0 0
        %491 = vmatprep.mubr.bf16.mxu0 0
        %492 = vmatmul.mubr.bf16.gmra.mrb[0].mxu0 %v454
        %v493 = vpop.f32.mrb[0].mxu0
        %v494 = vadd.f32 %v448, %v493
        %v495 = vpop.f32.mrb[0].mxu0
        %v496 = vpop.f32.mrb[0].mxu0
        %v497 = vpop.f32.mrb[0].mxu0
        %498 = vdwg.mxu0
        %v499 = vld [vmem:[%s188] sm:$0xf]
        %v500 = vld [vmem:[%s325] sm:$0xf]
        %v503 = vunpack.c.l.s4 1983009808
        %v504 = vunpack.c.0.s8 %v503
        %v505 = vlaneseq
        %v506 = vshrl.u32 %v505, 7
        %v507 = vsub.s32 %v504, %v506
        %v508 = vrot.slane %v499, %v507
        %v509 = vcombine.high %v508, %v508
        %510 = vrot.lane.b32.xlu0 %v508, 127
        %v511 = vpop.permute.xlu0 %510
        %512 = vrot.lane.b32.xlu0 %v509, 127
        %v513 = vpop.permute.xlu0 %512
        %vm514 = vcmask 1039360
        %v515 = vsel %vm514, %v511, %v513
        %v517 = vsel %vm229, %v500, 0
        %v520 = vsel %vm233, %v515, 0
        %522 = vmatprep.subr.bf16.mxu0 0
        %523 = vmatpush1.bf16.msra.mxu0 %v520
        %524 = vmatprep.subr.bf16.mxu0 0
        %525 = vmatpush1.bf16.msra.mxu0 0
        %526 = vmatprep.subr.bf16.mxu0 0
        %527 = vmatpush1.bf16.msra.mxu0 0
        %528 = vmatprep.subr.bf16.mxu0 0
        %529 = vmatpush1.bf16.msra.mxu0 0
        %530 = vmatprep.subr.bf16.mxu0 0
        %531 = vmatpush1.bf16.msra.mxu0 0
        %532 = vmatprep.subr.bf16.mxu0 0
        %533 = vmatpush1.bf16.msra.mxu0 0
        %534 = vmatprep.subr.bf16.mxu0 0
        %535 = vmatpush1.bf16.msra.mxu0 0
        %536 = vmatprep.subr.bf16.mxu0 0
        %537 = vmatpush1.bf16.msra.mxu0 0
        %538 = vmatprep.subr.bf16.mxu0 0
        %539 = vmatpush1.bf16.msra.mxu0 0
        %540 = vmatprep.subr.bf16.mxu0 0
        %541 = vmatpush1.bf16.msra.mxu0 0
        %542 = vmatprep.subr.bf16.mxu0 0
        %543 = vmatpush1.bf16.msra.mxu0 0
        %544 = vmatprep.subr.bf16.mxu0 0
        %545 = vmatpush1.bf16.msra.mxu0 0
        %546 = vmatprep.subr.bf16.mxu0 0
        %547 = vmatpush1.bf16.msra.mxu0 0
        %548 = vmatprep.subr.bf16.mxu0 0
        %549 = vmatpush1.bf16.msra.mxu0 0
        %550 = vmatprep.subr.bf16.mxu0 0
        %551 = vmatpush1.bf16.msra.mxu0 0
        %552 = vmatprep.subr.bf16.mxu0 0
        %553 = vmatpush1.bf16.msra.mxu0 0
        %554 = vmatprep.mubr.bf16.mxu0 0
        %555 = vmatmul.mubr.bf16.gmra.mrb[0].mxu0 %v517
        %v556 = vpop.f32.mrb[0].mxu0
        %v557 = vadd.f32 0.0, %v556
        %v558 = vpop.f32.mrb[0].mxu0
        %v559 = vpop.f32.mrb[0].mxu0
        %v560 = vpop.f32.mrb[0].mxu0
        %561 = vdwg.mxu0
        %v562 = vadd.f32 %v494, %v557
        // Predicated region
        $region45: #{tpu_custom_call.1} parent=27 // pred_check
          %p563 = pneg %p374
        $region46: #{tpu_custom_call.1} parent=27 // pred_check_branch
          %565 = sbr.rel (%p563) target = $region48
        $region47: #{tpu_custom_call.1} parent=27 // pred_region
          %v566 = vld [vmem:[%s208] sm:$0xff]
          %v567 = vadd.f32 %v566, %v562
          %568 = vst [vmem:[%s208] sm:$0xff] %v567
          %v569 = vld [vmem:[%s215] sm:$0xff]
          %v570 = vmul.f32 %v562, %v562
          %v571 = vadd.f32 %v569, %v570
          %572 = vst [vmem:[%s215] sm:$0xff] %v571
        $region48: #{tpu_custom_call.1} parent=27 // pred_fallthru
          _
        // Predicated region
        $region49: #{tpu_custom_call.1} parent=27 // pred_check
          %p573 = pneg %p217
        $region50: #{tpu_custom_call.1} parent=27 // pred_check_branch
          %575 = sbr.rel (%p573) target = $region52
        $region51: #{tpu_custom_call.1} parent=27 // pred_region
          %v576 = vlaneseq
          %v577 = vand.u32 %v576, 127
          %s578 = smul.u32 %s29, 128
          %v579 = vstv %s578
          %v580 = vadd.s32 %v579, %v577
          %v581 = vmul.u32 %v580, 3
          %v582 = vadd.s32 %v581, 1
          %vm583 = vcmp.lt.s32.totalorder %v582, 14
          %v584 = vsel %vm583, %v562, 0.0
          %v585 = vld [vmem:[%s208] sm:$0xff]
          %v586 = vadd.f32 %v585, %v584
          %587 = vst [vmem:[%s208] sm:$0xff] %v586
          %v588 = vld [vmem:[%s215] sm:$0xff]
          %v589 = vmul.f32 %v584, %v562
          %v590 = vadd.f32 %v588, %v589
          %591 = vst [vmem:[%s215] sm:$0xff] %v590
        $region52: #{tpu_custom_call.1} parent=27 // pred_fallthru
          _
        %v592 = vld [vmem:[%s323] sm:$0x3]
        %v593 = vld [vmem:[%s1] sm:$0xf]
        %v594 = vld [vmem:[%s188] sm:$0xf]
        %v595 = vld [vmem:[%s227] sm:$0xf]
        %v598 = vunpack.c.l.s4 1983009808
        %v599 = vunpack.c.0.s8 %v598
        %v600 = vlaneseq
        %v601 = vshrl.u32 %v600, 7
        %v602 = vsub.s32 %v599, %v601
        %v603 = vrot.slane %v594, %v602
        %v604 = vcombine.high %v603, %v603
        %605 = vrot.lane.b32.xlu0 %v603, 127
        %v606 = vpop.permute.xlu0 %605
        %607 = vrot.lane.b32.xlu0 %v604, 127
        %v608 = vpop.permute.xlu0 %607
        %v609 = vsel %vm514, %v606, %v608
        %v611 = vsel %vm229, %v595, 0
        %v614 = vsel %vm233, %v609, 0
        %616 = vmatprep.subr.bf16.mxu0 0
        %617 = vmatpush1.bf16.msra.mxu0 %v614
        %618 = vmatprep.subr.bf16.mxu0 0
        %619 = vmatpush1.bf16.msra.mxu0 0
        %620 = vmatprep.subr.bf16.mxu0 0
        %621 = vmatpush1.bf16.msra.mxu0 0
        %622 = vmatprep.subr.bf16.mxu0 0
        %623 = vmatpush1.bf16.msra.mxu0 0
        %624 = vmatprep.subr.bf16.mxu0 0
        %625 = vmatpush1.bf16.msra.mxu0 0
        %626 = vmatprep.subr.bf16.mxu0 0
        %627 = vmatpush1.bf16.msra.mxu0 0
        %628 = vmatprep.subr.bf16.mxu0 0
        %629 = vmatpush1.bf16.msra.mxu0 0
        %630 = vmatprep.subr.bf16.mxu0 0
        %631 = vmatpush1.bf16.msra.mxu0 0
        %632 = vmatprep.subr.bf16.mxu0 0
        %633 = vmatpush1.bf16.msra.mxu0 0
        %634 = vmatprep.subr.bf16.mxu0 0
        %635 = vmatpush1.bf16.msra.mxu0 0
        %636 = vmatprep.subr.bf16.mxu0 0
        %637 = vmatpush1.bf16.msra.mxu0 0
        %638 = vmatprep.subr.bf16.mxu0 0
        %639 = vmatpush1.bf16.msra.mxu0 0
        %640 = vmatprep.subr.bf16.mxu0 0
        %641 = vmatpush1.bf16.msra.mxu0 0
        %642 = vmatprep.subr.bf16.mxu0 0
        %643 = vmatpush1.bf16.msra.mxu0 0
        %644 = vmatprep.subr.bf16.mxu0 0
        %645 = vmatpush1.bf16.msra.mxu0 0
        %646 = vmatprep.subr.bf16.mxu0 0
        %647 = vmatpush1.bf16.msra.mxu0 0
        %648 = vmatprep.mubr.bf16.mxu0 0
        %649 = vmatmul.mubr.bf16.gmra.mrb[0].mxu0 %v611
        %v650 = vpop.f32.mrb[0].mxu0
        %v651 = vadd.f32 0.0, %v650
        %v652 = vpop.f32.mrb[0].mxu0
        %v653 = vpop.f32.mrb[0].mxu0
        %v654 = vpop.f32.mrb[0].mxu0
        %655 = vdwg.mxu0
        %v657 = vsel %vm229, %v593, 0
        %v660 = vsel %vm233, %v592, 0
        %662 = vmatprep.subr.bf16.mxu0 0
        %663 = vmatpush1.bf16.msra.mxu0 %v660
        %664 = vmatprep.subr.bf16.mxu0 0
        %665 = vmatpush1.bf16.msra.mxu0 0
        %666 = vmatprep.subr.bf16.mxu0 0
        %667 = vmatpush1.bf16.msra.mxu0 0
        %668 = vmatprep.subr.bf16.mxu0 0
        %669 = vmatpush1.bf16.msra.mxu0 0
        %670 = vmatprep.subr.bf16.mxu0 0
        %671 = vmatpush1.bf16.msra.mxu0 0
        %672 = vmatprep.subr.bf16.mxu0 0
        %673 = vmatpush1.bf16.msra.mxu0 0
        %674 = vmatprep.subr.bf16.mxu0 0
        %675 = vmatpush1.bf16.msra.mxu0 0
        %676 = vmatprep.subr.bf16.mxu0 0
        %677 = vmatpush1.bf16.msra.mxu0 0
        %678 = vmatprep.subr.bf16.mxu0 0
        %679 = vmatpush1.bf16.msra.mxu0 0
        %680 = vmatprep.subr.bf16.mxu0 0
        %681 = vmatpush1.bf16.msra.mxu0 0
        %682 = vmatprep.subr.bf16.mxu0 0
        %683 = vmatpush1.bf16.msra.mxu0 0
        %684 = vmatprep.subr.bf16.mxu0 0
        %685 = vmatpush1.bf16.msra.mxu0 0
        %686 = vmatprep.subr.bf16.mxu0 0
        %687 = vmatpush1.bf16.msra.mxu0 0
        %688 = vmatprep.subr.bf16.mxu0 0
        %689 = vmatpush1.bf16.msra.mxu0 0
        %690 = vmatprep.subr.bf16.mxu0 0
        %691 = vmatpush1.bf16.msra.mxu0 0
        %692 = vmatprep.subr.bf16.mxu0 0
        %693 = vmatpush1.bf16.msra.mxu0 0
        %694 = vmatprep.mubr.bf16.mxu0 0
        %695 = vmatmul.mubr.bf16.gmra.mrb[0].mxu0 %v657
        %v696 = vpop.f32.mrb[0].mxu0
        %v697 = vadd.f32 %v651, %v696
        %v698 = vpop.f32.mrb[0].mxu0
        %v699 = vpop.f32.mrb[0].mxu0
        %v700 = vpop.f32.mrb[0].mxu0
        %701 = vdwg.mxu0
        %v702 = vld [vmem:[%s225] sm:$0xf]
        %v703 = vld [vmem:[%s325] sm:$0xf]
        %v706 = vunpack.c.l.s4 1983009808
        %v707 = vunpack.c.0.s8 %v706
        %v708 = vlaneseq
        %v709 = vshrl.u32 %v708, 7
        %v710 = vsub.s32 %v707, %v709
        %v711 = vrot.slane %v702, %v710
        %v712 = vcombine.high %v711, %v711
        %713 = vrot.lane.b32.xlu0 %v711, 127
        %v714 = vpop.permute.xlu0 %713
        %715 = vrot.lane.b32.xlu0 %v712, 127
        %v716 = vpop.permute.xlu0 %715
        %v717 = vsel %vm514, %v714, %v716
        %v719 = vsel %vm229, %v703, 0
        %v722 = vsel %vm233, %v717, 0
        %724 = vmatprep.subr.bf16.mxu0 0
        %725 = vmatpush1.bf16.msra.mxu0 %v722
        %726 = vmatprep.subr.bf16.mxu0 0
        %727 = vmatpush1.bf16.msra.mxu0 0
        %728 = vmatprep.subr.bf16.mxu0 0
        %729 = vmatpush1.bf16.msra.mxu0 0
        %730 = vmatprep.subr.bf16.mxu0 0
        %731 = vmatpush1.bf16.msra.mxu0 0
        %732 = vmatprep.subr.bf16.mxu0 0
        %733 = vmatpush1.bf16.msra.mxu0 0
        %734 = vmatprep.subr.bf16.mxu0 0
        %735 = vmatpush1.bf16.msra.mxu0 0
        %736 = vmatprep.subr.bf16.mxu0 0
        %737 = vmatpush1.bf16.msra.mxu0 0
        %738 = vmatprep.subr.bf16.mxu0 0
        %739 = vmatpush1.bf16.msra.mxu0 0
        %740 = vmatprep.subr.bf16.mxu0 0
        %741 = vmatpush1.bf16.msra.mxu0 0
        %742 = vmatprep.subr.bf16.mxu0 0
        %743 = vmatpush1.bf16.msra.mxu0 0
        %744 = vmatprep.subr.bf16.mxu0 0
        %745 = vmatpush1.bf16.msra.mxu0 0
        %746 = vmatprep.subr.bf16.mxu0 0
        %747 = vmatpush1.bf16.msra.mxu0 0
        %748 = vmatprep.subr.bf16.mxu0 0
        %749 = vmatpush1.bf16.msra.mxu0 0
        %750 = vmatprep.subr.bf16.mxu0 0
        %751 = vmatpush1.bf16.msra.mxu0 0
        %752 = vmatprep.subr.bf16.mxu0 0
        %753 = vmatpush1.bf16.msra.mxu0 0
        %754 = vmatprep.subr.bf16.mxu0 0
        %755 = vmatpush1.bf16.msra.mxu0 0
        %756 = vmatprep.mubr.bf16.mxu0 0
        %757 = vmatmul.mubr.bf16.gmra.mrb[0].mxu0 %v719
        %v758 = vpop.f32.mrb[0].mxu0
        %v759 = vadd.f32 0.0, %v758
        %v760 = vpop.f32.mrb[0].mxu0
        %v761 = vpop.f32.mrb[0].mxu0
        %v762 = vpop.f32.mrb[0].mxu0
        %763 = vdwg.mxu0
        %v764 = vadd.f32 %v697, %v759
        // Predicated region
        $region53: #{tpu_custom_call.1} parent=27 // pred_check
          %p765 = pneg %p374
        $region54: #{tpu_custom_call.1} parent=27 // pred_check_branch
          %767 = sbr.rel (%p765) target = $region56
        $region55: #{tpu_custom_call.1} parent=27 // pred_region
          %v768 = vld [vmem:[%s208] sm:$0xff]
          %v769 = vadd.f32 %v768, %v764
          %770 = vst [vmem:[%s208] sm:$0xff] %v769
          %v771 = vld [vmem:[%s215] sm:$0xff]
          %v772 = vmul.f32 %v764, %v764
          %v773 = vadd.f32 %v771, %v772
          %774 = vst [vmem:[%s215] sm:$0xff] %v773
        $region56: #{tpu_custom_call.1} parent=27 // pred_fallthru
          _
        // Predicated region
        $region57: #{tpu_custom_call.1} parent=27 // pred_check
          %p775 = pneg %p217
        $region58: #{tpu_custom_call.1} parent=27 // pred_check_branch
          %777 = sbr.rel (%p775) target = $region60
        $region59: #{tpu_custom_call.1} parent=27 // pred_region
          %v778 = vlaneseq
          %v779 = vand.u32 %v778, 127
          %s780 = smul.u32 %s29, 128
          %v781 = vstv %s780
          %v782 = vadd.s32 %v781, %v779
          %v783 = vmul.u32 %v782, 3
          %v784 = vadd.s32 %v783, 2
          %vm785 = vcmp.lt.s32.totalorder %v784, 14
          %v786 = vsel %vm785, %v764, 0.0
          %v787 = vld [vmem:[%s208] sm:$0xff]
          %v788 = vadd.f32 %v787, %v786
          %789 = vst [vmem:[%s208] sm:$0xff] %v788
          %v790 = vld [vmem:[%s215] sm:$0xff]
          %v791 = vmul.f32 %v786, %v764
          %v792 = vadd.f32 %v790, %v791
          %793 = vst [vmem:[%s215] sm:$0xff] %v792
        $region60: #{tpu_custom_call.1} parent=27 // pred_fallthru
          _
        %s794 = sand.u32 %s93, 1
        %s795 = scalar_lea.sflag [#allocation4], %s794
        %s796 = sand.u32 %s93, 1
        %s797 = smul.addr %s796, 8
        %s798 = scalar_lea.vmem [#allocation5], %s797
        %s799 = sand.u32 %s119, 1
        %s800 = scalar_lea.sflag [#allocation7], %s799
        %s801 = sand.u32 %s119, 1
        %s802 = smul.addr %s801, 8
        %s803 = scalar_lea.vmem [#allocation6], %s802
        // Predicated region
        $region61: #{tpu_custom_call.1} parent=27 // pred_check
          %p804 = pneg %p103
        $region62: #{tpu_custom_call.1} parent=27 // pred_check_branch
          %806 = sbr.rel (%p804) target = $region64
        $region63: #{tpu_custom_call.1} parent=27 // pred_region
          %s808 = ssub.s32 128, 128
          %809 = vsyncadd %s795, %s808
          %s810 = smul.addr %s28, 128
          %s811 = scalar_lea.hbm %s2, %s810
          %s813 = sshll.u32 %s798, 4
          %s814 = int_to_ptr.vmem [resolvable:$true] %s813
          %816 = dma.vmem_to_hbm [thread:$0]  %s814, 128, %s811, %s795
        $region64: #{tpu_custom_call.1} parent=27 // pred_fallthru
          _
        // Predicated region
        $region65: #{tpu_custom_call.1} parent=27 // pred_check
          %p817 = pneg %p129
        $region66: #{tpu_custom_call.1} parent=27 // pred_check_branch
          %819 = sbr.rel (%p817) target = $region68
        $region67: #{tpu_custom_call.1} parent=27 // pred_region
          %s821 = ssub.s32 128, 128
          %822 = vsyncadd %s800, %s821
          %s823 = smul.addr %s28, 128
          %s824 = scalar_lea.hbm %s3, %s823
          %s826 = sshll.u32 %s803, 4
          %s827 = int_to_ptr.vmem [resolvable:$true] %s826
          %829 = dma.vmem_to_hbm [thread:$0]  %s827, 128, %s824, %s800
        $region68: #{tpu_custom_call.1} parent=27 // pred_fallthru
          _
      $region28: #{tpu_custom_call.1} parent=5 // pred_fallthru
        _
      %p830 = scmp.le.s32.totalorder 2, %s19
      // Predicated region
      $region69: #{tpu_custom_call.1} parent=5 // pred_check
        %p831 = pneg %p830
      $region70: #{tpu_custom_call.1} parent=5 // pred_check_branch
        %833 = sbr.rel (%p831) target = $region72
      $region71: #{tpu_custom_call.1} parent=5 // pred_region
        %s834 = ssub.s32 %s19, 2
        // Predicated region
        $region73: #{tpu_custom_call.1} parent=71 // pred_check
          %p835 = pneg %p109
        $region74: #{tpu_custom_call.1} parent=71 // pred_check_branch
          %837 = sbr.rel (%p835) target = $region76
        $region75: #{tpu_custom_call.1} parent=71 // pred_region
          %s838 = sand.u32 %s94, 1
          %s839 = scalar_lea.sflag [#allocation4], %s838
          %s840 = sand.u32 %s94, 1
          %s841 = smul.addr %s840, 8
          %s842 = scalar_lea.vmem [#allocation5], %s841
          %843 = dma.done %s839, 128
        $region76: #{tpu_custom_call.1} parent=71 // pred_fallthru
          _
        // Predicated region
        $region77: #{tpu_custom_call.1} parent=71 // pred_check
          %p844 = pneg %p135
        $region78: #{tpu_custom_call.1} parent=71 // pred_check_branch
          %846 = sbr.rel (%p844) target = $region80
        $region79: #{tpu_custom_call.1} parent=71 // pred_region
          %s847 = sand.u32 %s120, 1
          %s848 = scalar_lea.sflag [#allocation7], %s847
          %s849 = sand.u32 %s120, 1
          %s850 = smul.addr %s849, 8
          %s851 = scalar_lea.vmem [#allocation6], %s850
          %852 = dma.done %s848, 128
        $region80: #{tpu_custom_call.1} parent=71 // pred_fallthru
          _
      $region72: #{tpu_custom_call.1} parent=5 // pred_fallthru
        _
    $region6: #{tpu_custom_call.1} parent=1 // loop_footer
      %s23 = sadd.s32 1, %s19
    $region7: #{tpu_custom_call.1} parent=1 // loop_footer_branch
      %18 = sbr.rel target = $region3
    $region8: #{tpu_custom_call.1} parent=1 // loop_exit
      _
    %853 = vsyncpa [#allocation3], 1
    %s854 = scalar_lea.sflag [#allocation3], 1
    %855 = vsyncpa %s854, 1
    %856 = vsyncpa [#allocation4], 1
    %s857 = scalar_lea.sflag [#allocation4], 1
    %858 = vsyncpa %s857, 1
    %859 = vsyncpa [#allocation7], 1
    %s860 = scalar_lea.sflag [#allocation7], 1
    %861 = vsyncpa %s860, 1

</llo_original>
